<compile_context>
chip_gen: v5e
topology: v5e:2x2
jax: 0.10.0
libtpu: 0.0.40
codegen_flags: <defaults>
</compile_context>

<pallas_src>
import functools

import jax
import jax.numpy as jnp
from jax.experimental import pallas as pl
from jax.experimental.pallas import tpu as pltpu

_LN_EPS = 1e-5


# ------------------------------ Pallas kernels ------------------------------ #
def _linear_ln_kernel(x_ref, w_ref, b_ref, g_ref, beta_ref, o_ref, *, eps):
    # matmul + bias + LayerNorm over the output (embedding) axis, f32 accumulation.
    acc = jnp.dot(x_ref[...], w_ref[...], preferred_element_type=jnp.float32)
    acc = acc + b_ref[...]
    mean = jnp.mean(acc, axis=-1, keepdims=True)
    xc = acc - mean
    var = jnp.mean(xc * xc, axis=-1, keepdims=True)
    y = xc * jax.lax.rsqrt(var + eps) * g_ref[...] + beta_ref[...]
    o_ref[...] = y.astype(o_ref.dtype)


def _attention_kernel(x_ref, xkv_ref, wq_ref, bq_ref, wk_ref, bk_ref,
                      wv_ref, bv_ref, wp_ref, bp_ref, o_ref,
                      k_scr, v_scr, q_scr, acc_scr, *, num_heads, scale):
    # x_ref:   (1, TN, C)   query-token tile
    # xkv_ref: (1, Nkv, C)  kv-source sequence for this batch element
    # w*_ref:  (C, C)       weights; b*_ref: (1, C) biases
    # k_scr/v_scr: (H, Nkv, d) head-major K/V scratch (persist across q tiles)
    # q_scr:   (H, TN, d)   head-major Q scratch (per tile)
    # acc_scr: (TN, C)      head-merge scratch (per tile)
    dtype = x_ref.dtype
    C = x_ref.shape[-1]
    d = C // num_heads

    # --- once per batch element (q-tile index 0): project kv source -> K/V scratch.
    @pl.when(pl.program_id(1) == 0)
    def _():
        xkv = xkv_ref[0]                                              # (Nkv, C)
        k2 = (jnp.dot(xkv, wk_ref[...], preferred_element_type=jnp.float32)
              + bk_ref[...])
        v2 = (jnp.dot(xkv, wv_ref[...], preferred_element_type=jnp.float32)
              + bv_ref[...])
        for h in range(num_heads):                                    # amortized once/batch
            k_scr[h, :, :] = k2[:, h * d:(h + 1) * d].astype(k_scr.dtype)
            v_scr[h, :, :] = v2[:, h * d:(h + 1) * d].astype(v_scr.dtype)

    # --- q projection; scale applied once to q (TN, C), not to each score tile.
    x = x_ref[0]                                                      # (TN, C)
    q = (jnp.dot(x, wq_ref[...], preferred_element_type=jnp.float32)
         + bq_ref[...]) * scale
    for h in range(num_heads):
        q_scr[h, :, :] = q[:, h * d:(h + 1) * d].astype(q_scr.dtype)

    qh = q_scr[...]                                                   # (H, TN, d)
    kh = k_scr[...]                                                   # (H, Nkv, d)
    vh = v_scr[...]                                                   # (H, Nkv, d)

    # --- batched (per-head) attention; normalization AFTER the PV matmul.
    s = jnp.einsum("hqd,hkd->hqk", qh, kh,
                   preferred_element_type=jnp.float32)                # (H, TN, Nkv) f32
    m = jnp.max(s, axis=-1, keepdims=True)
    p = jnp.exp(s - m)
    l = jnp.sum(p, axis=-1, keepdims=True)                            # (H, TN, 1)
    o = jnp.einsum("hqk,hkd->hqd", p.astype(vh.dtype), vh,
                   preferred_element_type=jnp.float32)                # (H, TN, d)
    o = o * pl.reciprocal(l, approx=True)                             # EUP, not VPU divide

    # --- merge heads into (TN, C) via scratch slices (no concatenate relayout).
    for h in range(num_heads):
        acc_scr[:, h * d:(h + 1) * d] = o[h].astype(acc_scr.dtype)

    y = (jnp.dot(acc_scr[...], wp_ref[...], preferred_element_type=jnp.float32)
         + bp_ref[...])
    o_ref[0, :, :] = y.astype(o_ref.dtype)


# ------------------------------- helpers ------------------------------------ #
def _tile_and_pad(n, target):
    """Pick a tile size <= target.  Prefer one that divides n (no padding) and
    is sublane-friendly (multiple of 8); fall back to padding otherwise."""
    if n <= target:
        return n, n
    t = (target // 8) * 8
    while t >= 8:
        if n % t == 0:
            return t, n
        t -= 8
    t = max((target // 8) * 8, 8)
    return t, pl.cdiv(n, t) * t


def _attn_vmem_estimate(TN, Nkv, C, num_heads, isz):
    """Rough VMEM footprint (bytes) of the fused attention kernel."""
    d = C // num_heads
    dpad = -(-d // 128) * 128
    cpad = -(-C // 128) * 128
    kvp = -(-Nkv // 8) * 8
    tnp = -(-TN // 8) * 8
    return (2 * tnp * cpad * isz                    # x tile (double buffered)
            + 2 * kvp * cpad * isz                  # kv-source block
            + 2 * tnp * cpad * isz                  # out tile
            + 2 * 4 * C * cpad * isz                # wq/wk/wv/wp (double buffered)
            + 2 * num_heads * kvp * dpad * isz      # K / V scratch
            + num_heads * tnp * dpad * isz          # Q scratch
            + tnp * cpad * isz                      # head-merge scratch
            + 3 * num_heads * tnp * Nkv * 4)        # s / p f32 live values


# ------------------------------- wrappers ------------------------------------ #
def _linear_ln(x2d, w, b, gamma, beta, *, eps=_LN_EPS, tile_m=512):
    """(M, K) @ (K, Nout) + b, then LayerNorm over Nout (fused), row-tiled."""
    M, K = x2d.shape
    Nout = w.shape[1]
    dtype = x2d.dtype
    TM, M_pad = _tile_and_pad(M, tile_m)
    xp = x2d if M_pad == M else jnp.pad(x2d, ((0, M_pad - M), (0, 0)))
    out = pl.pallas_call(
        functools.partial(_linear_ln_kernel, eps=eps),
        out_shape=jax.ShapeDtypeStruct((M_pad, Nout), dtype),
        grid_spec=pltpu.PrefetchScalarGridSpec(
            num_scalar_prefetch=0,
            grid=(M_pad // TM,),
            in_specs=[
                pl.BlockSpec((TM, K), lambda i: (i, 0)),
                pl.BlockSpec((K, Nout), lambda i: (0, 0)),
                pl.BlockSpec((1, Nout), lambda i: (0, 0)),
                pl.BlockSpec((1, Nout), lambda i: (0, 0)),
                pl.BlockSpec((1, Nout), lambda i: (0, 0)),
            ],
            out_specs=pl.BlockSpec((TM, Nout), lambda i: (i, 0)),
        ),
        compiler_params=pltpu.CompilerParams(dimension_semantics=("parallel",)),
    )(xp, w, b.reshape(1, Nout), gamma.reshape(1, Nout), beta.reshape(1, Nout))
    return out if M_pad == M else out[:M]


def _fused_attention(x, x_kv, wq, bq, wk, bk, wv, bv, wp, bp, *,
                     num_heads, scale, tile_n=512):
    """Fused kv-proj (once per batch elem) + q-proj + MHA + output projection."""
    B, N, C = x.shape
    Nkv = x_kv.shape[1]
    d = C // num_heads
    dtype = x.dtype

    TN, N_pad = _tile_and_pad(N, tile_n)
    xp = x if N_pad == N else jnp.pad(x, ((0, 0), (0, N_pad - N), (0, 0)))

    isz = jnp.dtype(dtype).itemsize
    est = _attn_vmem_estimate(TN, Nkv, C, num_heads, isz)
    vmem_limit = int(min(2 * est, 64 * 2 ** 20)) if est > 30 * 2 ** 20 else None

    out = pl.pallas_call(
        functools.partial(_attention_kernel, num_heads=num_heads, scale=scale),
        out_shape=jax.ShapeDtypeStruct((B, N_pad, C), dtype),
        grid_spec=pltpu.PrefetchScalarGridSpec(
            num_scalar_prefetch=0,
            grid=(B, N_pad // TN),
            in_specs=[
                pl.BlockSpec((1, TN, C), lambda b, i: (b, i, 0)),    # query tokens
                pl.BlockSpec((1, Nkv, C), lambda b, i: (b, 0, 0)),   # kv source (per batch)
                pl.BlockSpec((C, C), lambda b, i: (0, 0)),           # Wq
                pl.BlockSpec((1, C), lambda b, i: (0, 0)),           # bq
                pl.BlockSpec((C, C), lambda b, i: (0, 0)),           # Wk
                pl.BlockSpec((1, C), lambda b, i: (0, 0)),           # bk
                pl.BlockSpec((C, C), lambda b, i: (0, 0)),           # Wv
                pl.BlockSpec((1, C), lambda b, i: (0, 0)),           # bv
                pl.BlockSpec((C, C), lambda b, i: (0, 0)),           # Wproj
                pl.BlockSpec((1, C), lambda b, i: (0, 0)),           # bproj
            ],
            out_specs=pl.BlockSpec((1, TN, C), lambda b, i: (b, i, 0)),
            scratch_shapes=[
                pltpu.VMEM((num_heads, Nkv, d), dtype),   # K (head-major, per batch)
                pltpu.VMEM((num_heads, Nkv, d), dtype),   # V
                pltpu.VMEM((num_heads, TN, d), dtype),    # Q (per tile)
                pltpu.VMEM((TN, C), dtype),               # head merge
            ],
        ),
        # q-tile axis carries the K/V scratch dependency -> "arbitrary";
        # batch axis is "parallel" so multi-TC chips shard over it.
        compiler_params=pltpu.CompilerParams(
            dimension_semantics=("parallel", "arbitrary"),
            vmem_limit_bytes=vmem_limit),
    )(xp, x_kv, wq, bq.reshape(1, C), wk, bk.reshape(1, C),
      wv, bv.reshape(1, C), wp, bp.reshape(1, C))
    return out if N_pad == N else out[:, :N, :]


def attention_forward(x, H, W, p, *, num_heads, sr_ratio=1, qk_scale=None, tile_n=512):
    """Pallas-backed forward of the PVT Attention module.  x: (B, N, C), N = H*W."""
    B, N, C = x.shape
    d = C // num_heads
    scale = qk_scale if qk_scale is not None else d ** (-0.5)

    if sr_ratio > 1:
        # sr conv has kernel_size == stride -> non-overlapping patches (pure reshape,
        # no im2col inflation), fused matmul + bias + LayerNorm kernel.
        Hs, Ws = H // sr_ratio, W // sr_ratio
        patches = (x.reshape(B, Hs, sr_ratio, Ws, sr_ratio, C)
                     .transpose(0, 1, 3, 5, 2, 4)
                     .reshape(B * Hs * Ws, C * sr_ratio * sr_ratio))
        w2d = p["w_sr"].reshape(C, C * sr_ratio * sr_ratio).T        # (C*sr*sr, C)
        x_kv = _linear_ln(patches, w2d, p["b_sr"], p["g_norm"], p["beta_norm"])
        Nkv = Hs * Ws
        x_kv = x_kv.reshape(B, Nkv, C)
    else:
        x_kv = x

    # torch kv layout: columns [0:C] = K (all heads), [C:2C] = V (all heads).
    wk, wv = p["wkv"][:, :C], p["wkv"][:, C:]
    bk, bv = p["bkv"][:C], p["bkv"][C:]

    # TODO(synk): attn_drop / proj_drop are identity at p=0.0 (eval); not materialized.
    return _fused_attention(x, x_kv, p["wq"], p["bq"], wk, bk, wv, bv,
                            p["wproj"], p["bproj"],
                            num_heads=num_heads, scale=scale, tile_n=tile_n)


# --------------------------- pure-JAX reference ----------------------------- #
def attention_ref(x, H, W, p, *, num_heads, sr_ratio=1, qk_scale=None):
    B, N, C = x.shape
    d = C // num_heads
    scale = qk_scale if qk_scale is not None else d ** (-0.5)

    q = x @ p["wq"] + p["bq"]
    q = q.reshape(B, N, num_heads, d).transpose(0, 2, 1, 3)

    if sr_ratio > 1:
        x_ = x.transpose(0, 2, 1).reshape(B, C, H, W)
        x_ = jax.lax.conv_general_dilated(
            x_, p["w_sr"], window_strides=(sr_ratio, sr_ratio), padding="VALID",
            dimension_numbers=("NCHW", "OIHW", "NCHW"))
        x_ = x_ + p["b_sr"][None, :, None, None]
        x_ = x_.reshape(B, C, -1).transpose(0, 2, 1)
        mu = x_.mean(-1, keepdims=True)
        var = ((x_ - mu) ** 2).mean(-1, keepdims=True)
        src = (x_ - mu) * jax.lax.rsqrt(var + _LN_EPS) * p["g_norm"] + p["beta_norm"]
    else:
        src = x
    Nkv = src.shape[1]

    kv = src @ p["wkv"] + p["bkv"]
    kv = kv.reshape(B, Nkv, 2, num_heads, d).transpose(2, 0, 3, 1, 4)
    k, v = kv[0], kv[1]

    attn = jnp.einsum("bhqd,bhkd->bhqk", q, k) * scale
    attn = jax.nn.softmax(attn, axis=-1)
    o = jnp.einsum("bhqk,bhkd->bhqd", attn, v)
    o = o.transpose(0, 2, 1, 3).reshape(B, N, C)
    return o @ p["wproj"] + p["bproj"]


# ----------------------------------- main ------------------------------------ #
def _make_params(key, C, sr_ratio, qkv_bias):
    ks = jax.random.split(key, 8)
    s = 0.06
    p = {
        "wq": s * jax.random.normal(ks[0], (C, C), jnp.float32),
        "bq": (0.01 * jax.random.normal(ks[1], (C,), jnp.float32)
               if qkv_bias else jnp.zeros((C,), jnp.float32)),
        "wkv": s * jax.random.normal(ks[2], (C, 2 * C), jnp.float32),
        "bkv": (0.01 * jax.random.normal(ks[3], (2 * C,), jnp.float32)
                if qkv_bias else jnp.zeros((2 * C,), jnp.float32)),
        "wproj": s * jax.random.normal(ks[4], (C, C), jnp.float32),
        "bproj": 0.01 * jax.random.normal(ks[5], (C,), jnp.float32),
    }
    if sr_ratio > 1:
        p["w_sr"] = s * jax.random.normal(ks[6], (C, C, sr_ratio, sr_ratio), jnp.float32)
        p["b_sr"] = 0.01 * jax.random.normal(ks[7], (C,), jnp.float32)
        p["g_norm"] = jnp.ones((C,), jnp.float32)
        p["beta_norm"] = jnp.zeros((C,), jnp.float32)
    return p


if __name__ == "__main__":
    B, C, H, W = 2, 32, 4, 4
    N = H * W
    num_heads = 4

    key = jax.random.PRNGKey(0)
    kx, kp1, kp2 = jax.random.split(key, 3)
    x = jax.random.normal(kx, (B, N, C), dtype=jnp.float32)

    # Case 1: sr_ratio=1, qkv_bias=False (module defaults), f32.
    p1 = _make_params(kp1, C, sr_ratio=1, qkv_bias=False)
    out1 = jax.block_until_ready(
        attention_forward(x, H, W, p1, num_heads=num_heads, sr_ratio=1))
    ref1 = attention_ref(x, H, W, p1, num_heads=num_heads, sr_ratio=1)
    assert out1.shape == (B, N, C)
    assert jnp.allclose(out1, ref1, atol=2e-2, rtol=2e-2), \
        float(jnp.max(jnp.abs(out1 - ref1)))

    # Case 2: sr_ratio=2 (spatial-reduction conv + LayerNorm path), qkv_bias=True.
    p2 = _make_params(kp2, C, sr_ratio=2, qkv_bias=True)
    out2 = jax.block_until_ready(
        attention_forward(x, H, W, p2, num_heads=num_heads, sr_ratio=2))
    ref2 = attention_ref(x, H, W, p2, num_heads=num_heads, sr_ratio=2)
    assert out2.shape == (B, N, C)
    assert jnp.allclose(out2, ref2, atol=2e-2, rtol=2e-2), \
        float(jnp.max(jnp.abs(out2 - ref2)))

    # Case 3: bf16 activations/weights (bf16 MXU matmuls, f32 accumulation),
    # output dtype follows input dtype; loose tolerance vs the f32 reference.
    x16 = x.astype(jnp.bfloat16)
    p16 = jax.tree_util.tree_map(lambda a: a.astype(jnp.bfloat16), p1)
    out3 = jax.block_until_ready(
        attention_forward(x16, H, W, p16, num_heads=num_heads, sr_ratio=1))
    assert out3.shape == (B, N, C) and out3.dtype == jnp.bfloat16
    assert jnp.allclose(out3.astype(jnp.float32), ref1, atol=6e-2, rtol=6e-2), \
        float(jnp.max(jnp.abs(out3.astype(jnp.float32) - ref1)))

    print("KERNEL_OK")
</pallas_src>

<mosaic_0001>
module attributes {stable_mosaic.version = 11 : i64} {
  func.func @_attention_kernel(%arg0: i32, %arg1: i32, %arg2: memref<1x16x32xf32, #tpu.memory_space<vmem>>, %arg3: memref<1x16x32xf32, #tpu.memory_space<vmem>>, %arg4: memref<32x32xf32, #tpu.memory_space<vmem>>, %arg5: memref<1x32xf32, #tpu.memory_space<vmem>>, %arg6: memref<32x32xf32, #tpu.memory_space<vmem>>, %arg7: memref<1x32xf32, #tpu.memory_space<vmem>>, %arg8: memref<32x32xf32, #tpu.memory_space<vmem>>, %arg9: memref<1x32xf32, #tpu.memory_space<vmem>>, %arg10: memref<32x32xf32, #tpu.memory_space<vmem>>, %arg11: memref<1x32xf32, #tpu.memory_space<vmem>>, %arg12: memref<1x16x32xf32, #tpu.memory_space<vmem>>, %arg13: memref<4x16x8xf32, #tpu.memory_space<vmem>>, %arg14: memref<4x16x8xf32, #tpu.memory_space<vmem>>, %arg15: memref<4x16x8xf32, #tpu.memory_space<vmem>>, %arg16: memref<16x32xf32, #tpu.memory_space<vmem>>) attributes {dimension_semantics = [#tpu.dimension_semantics<parallel>, #tpu.dimension_semantics<arbitrary>], iteration_bounds = array<i64: 2, 1>, scalar_prefetch = 0 : i64, scratch_operands = 4 : i64, tpu.core_type = #tpu.core_type<tc>, window_params = [{transform_indices = @transform_0, window_bounds = array<i64: 1, 16, 32>}, {transform_indices = @transform_1, window_bounds = array<i64: 1, 16, 32>}, {pipeline_mode = #tpu.pipeline_mode<synchronous>, transform_indices = @transform_2, window_bounds = array<i64: 32, 32>}, {pipeline_mode = #tpu.pipeline_mode<synchronous>, transform_indices = @transform_3, window_bounds = array<i64: 1, 32>}, {pipeline_mode = #tpu.pipeline_mode<synchronous>, transform_indices = @transform_4, window_bounds = array<i64: 32, 32>}, {pipeline_mode = #tpu.pipeline_mode<synchronous>, transform_indices = @transform_5, window_bounds = array<i64: 1, 32>}, {pipeline_mode = #tpu.pipeline_mode<synchronous>, transform_indices = @transform_6, window_bounds = array<i64: 32, 32>}, {pipeline_mode = #tpu.pipeline_mode<synchronous>, transform_indices = @transform_7, window_bounds = array<i64: 1, 32>}, {pipeline_mode = #tpu.pipeline_mode<synchronous>, transform_indices = @transform_8, window_bounds = array<i64: 32, 32>}, {pipeline_mode = #tpu.pipeline_mode<synchronous>, transform_indices = @transform_9, window_bounds = array<i64: 1, 32>}, {transform_indices = @transform_10, window_bounds = array<i64: 1, 16, 32>}]} {
    %c0_i32 = arith.constant 0 : i32
    %0 = arith.cmpi eq, %arg1, %c0_i32 : i32
    %1 = arith.extui %0 : i1 to i32
    %c0_i32_0 = arith.constant 0 : i32
    %2 = arith.cmpi ne, %1, %c0_i32_0 : i32
    scf.if %2 {
      %c0_45 = arith.constant 0 : index
      %c0_46 = arith.constant 0 : index
      %c0_47 = arith.constant 0 : index
      %64 = vector.load %arg3[%c0_45, %c0_46, %c0_47] : memref<1x16x32xf32, #tpu.memory_space<vmem>>, vector<1x16x32xf32>
      %65 = vector.shape_cast %64 : vector<1x16x32xf32> to vector<16x32xf32>
      %c0_48 = arith.constant 0 : index
      %c0_49 = arith.constant 0 : index
      %66 = vector.load %arg6[%c0_48, %c0_49] : memref<32x32xf32, #tpu.memory_space<vmem>>, vector<32x32xf32>
      %cst_50 = arith.constant dense<0.000000e+00> : vector<16x32xf32>
      %67 = tpu.matmul %65, %66, %cst_50 {dimension_numbers = #tpu.dot_dimension_numbers<[1], [0], [0], [1], [0, 0, 1, 1], [], []>} : vector<16x32xf32>, vector<32x32xf32>, vector<16x32xf32> -> vector<16x32xf32>
      %c0_51 = arith.constant 0 : index
      %c0_52 = arith.constant 0 : index
      %68 = vector.load %arg7[%c0_51, %c0_52] : memref<1x32xf32, #tpu.memory_space<vmem>>, vector<1x32xf32>
      %69 = vector.broadcast %68 : vector<1x32xf32> to vector<16x32xf32>
      %70 = arith.addf %67, %69 : vector<16x32xf32>
      %c0_53 = arith.constant 0 : index
      %c0_54 = arith.constant 0 : index
      %71 = vector.load %arg8[%c0_53, %c0_54] : memref<32x32xf32, #tpu.memory_space<vmem>>, vector<32x32xf32>
      %cst_55 = arith.constant dense<0.000000e+00> : vector<16x32xf32>
      %72 = tpu.matmul %65, %71, %cst_55 {dimension_numbers = #tpu.dot_dimension_numbers<[1], [0], [0], [1], [0, 0, 1, 1], [], []>} : vector<16x32xf32>, vector<32x32xf32>, vector<16x32xf32> -> vector<16x32xf32>
      %c0_56 = arith.constant 0 : index
      %c0_57 = arith.constant 0 : index
      %73 = vector.load %arg9[%c0_56, %c0_57] : memref<1x32xf32, #tpu.memory_space<vmem>>, vector<1x32xf32>
      %74 = vector.broadcast %73 : vector<1x32xf32> to vector<16x32xf32>
      %75 = arith.addf %72, %74 : vector<16x32xf32>
      %76 = vector.extract_strided_slice %70 {offsets = [0, 0], sizes = [16, 8], strides = [1, 1]} : vector<16x32xf32> to vector<16x8xf32>
      %c0_58 = arith.constant 0 : index
      %c0_59 = arith.constant 0 : index
      %c0_60 = arith.constant 0 : index
      %77 = vector.load %arg13[%c0_58, %c0_59, %c0_60] : memref<4x16x8xf32, #tpu.memory_space<vmem>>, vector<1x16x8xf32>
      %78 = vector.shape_cast %77 : vector<1x16x8xf32> to vector<16x8xf32>
      %79 = vector.shape_cast %76 : vector<16x8xf32> to vector<1x16x8xf32>
      tpu.vector_store %arg13[%c0_58, %c0_59, %c0_60], %79 {strides = array<i32>} : memref<4x16x8xf32, #tpu.memory_space<vmem>>, vector<1x16x8xf32>,
      %80 = vector.extract_strided_slice %75 {offsets = [0, 0], sizes = [16, 8], strides = [1, 1]} : vector<16x32xf32> to vector<16x8xf32>
      %c0_61 = arith.constant 0 : index
      %c0_62 = arith.constant 0 : index
      %c0_63 = arith.constant 0 : index
      %81 = vector.load %arg14[%c0_61, %c0_62, %c0_63] : memref<4x16x8xf32, #tpu.memory_space<vmem>>, vector<1x16x8xf32>
      %82 = vector.shape_cast %81 : vector<1x16x8xf32> to vector<16x8xf32>
      %83 = vector.shape_cast %80 : vector<16x8xf32> to vector<1x16x8xf32>
      tpu.vector_store %arg14[%c0_61, %c0_62, %c0_63], %83 {strides = array<i32>} : memref<4x16x8xf32, #tpu.memory_space<vmem>>, vector<1x16x8xf32>,
      %84 = vector.extract_strided_slice %70 {offsets = [0, 8], sizes = [16, 8], strides = [1, 1]} : vector<16x32xf32> to vector<16x8xf32>
      %c1_64 = arith.constant 1 : index
      %c0_65 = arith.constant 0 : index
      %c0_66 = arith.constant 0 : index
      %85 = vector.load %arg13[%c1_64, %c0_65, %c0_66] : memref<4x16x8xf32, #tpu.memory_space<vmem>>, vector<1x16x8xf32>
      %86 = vector.shape_cast %85 : vector<1x16x8xf32> to vector<16x8xf32>
      %87 = vector.shape_cast %84 : vector<16x8xf32> to vector<1x16x8xf32>
      tpu.vector_store %arg13[%c1_64, %c0_65, %c0_66], %87 {strides = array<i32>} : memref<4x16x8xf32, #tpu.memory_space<vmem>>, vector<1x16x8xf32>,
      %88 = vector.extract_strided_slice %75 {offsets = [0, 8], sizes = [16, 8], strides = [1, 1]} : vector<16x32xf32> to vector<16x8xf32>
      %c1_67 = arith.constant 1 : index
      %c0_68 = arith.constant 0 : index
      %c0_69 = arith.constant 0 : index
      %89 = vector.load %arg14[%c1_67, %c0_68, %c0_69] : memref<4x16x8xf32, #tpu.memory_space<vmem>>, vector<1x16x8xf32>
      %90 = vector.shape_cast %89 : vector<1x16x8xf32> to vector<16x8xf32>
      %91 = vector.shape_cast %88 : vector<16x8xf32> to vector<1x16x8xf32>
      tpu.vector_store %arg14[%c1_67, %c0_68, %c0_69], %91 {strides = array<i32>} : memref<4x16x8xf32, #tpu.memory_space<vmem>>, vector<1x16x8xf32>,
      %92 = vector.extract_strided_slice %70 {offsets = [0, 16], sizes = [16, 8], strides = [1, 1]} : vector<16x32xf32> to vector<16x8xf32>
      %c2_70 = arith.constant 2 : index
      %c0_71 = arith.constant 0 : index
      %c0_72 = arith.constant 0 : index
      %93 = vector.load %arg13[%c2_70, %c0_71, %c0_72] : memref<4x16x8xf32, #tpu.memory_space<vmem>>, vector<1x16x8xf32>
      %94 = vector.shape_cast %93 : vector<1x16x8xf32> to vector<16x8xf32>
      %95 = vector.shape_cast %92 : vector<16x8xf32> to vector<1x16x8xf32>
      tpu.vector_store %arg13[%c2_70, %c0_71, %c0_72], %95 {strides = array<i32>} : memref<4x16x8xf32, #tpu.memory_space<vmem>>, vector<1x16x8xf32>,
      %96 = vector.extract_strided_slice %75 {offsets = [0, 16], sizes = [16, 8], strides = [1, 1]} : vector<16x32xf32> to vector<16x8xf32>
      %c2_73 = arith.constant 2 : index
      %c0_74 = arith.constant 0 : index
      %c0_75 = arith.constant 0 : index
      %97 = vector.load %arg14[%c2_73, %c0_74, %c0_75] : memref<4x16x8xf32, #tpu.memory_space<vmem>>, vector<1x16x8xf32>
      %98 = vector.shape_cast %97 : vector<1x16x8xf32> to vector<16x8xf32>
      %99 = vector.shape_cast %96 : vector<16x8xf32> to vector<1x16x8xf32>
      tpu.vector_store %arg14[%c2_73, %c0_74, %c0_75], %99 {strides = array<i32>} : memref<4x16x8xf32, #tpu.memory_space<vmem>>, vector<1x16x8xf32>,
      %100 = vector.extract_strided_slice %70 {offsets = [0, 24], sizes = [16, 8], strides = [1, 1]} : vector<16x32xf32> to vector<16x8xf32>
      %c3_76 = arith.constant 3 : index
      %c0_77 = arith.constant 0 : index
      %c0_78 = arith.constant 0 : index
      %101 = vector.load %arg13[%c3_76, %c0_77, %c0_78] : memref<4x16x8xf32, #tpu.memory_space<vmem>>, vector<1x16x8xf32>
      %102 = vector.shape_cast %101 : vector<1x16x8xf32> to vector<16x8xf32>
      %103 = vector.shape_cast %100 : vector<16x8xf32> to vector<1x16x8xf32>
      tpu.vector_store %arg13[%c3_76, %c0_77, %c0_78], %103 {strides = array<i32>} : memref<4x16x8xf32, #tpu.memory_space<vmem>>, vector<1x16x8xf32>,
      %104 = vector.extract_strided_slice %75 {offsets = [0, 24], sizes = [16, 8], strides = [1, 1]} : vector<16x32xf32> to vector<16x8xf32>
      %c3_79 = arith.constant 3 : index
      %c0_80 = arith.constant 0 : index
      %c0_81 = arith.constant 0 : index
      %105 = vector.load %arg14[%c3_79, %c0_80, %c0_81] : memref<4x16x8xf32, #tpu.memory_space<vmem>>, vector<1x16x8xf32>
      %106 = vector.shape_cast %105 : vector<1x16x8xf32> to vector<16x8xf32>
      %107 = vector.shape_cast %104 : vector<16x8xf32> to vector<1x16x8xf32>
      tpu.vector_store %arg14[%c3_79, %c0_80, %c0_81], %107 {strides = array<i32>} : memref<4x16x8xf32, #tpu.memory_space<vmem>>, vector<1x16x8xf32>,
    } else {
    }
    %c0 = arith.constant 0 : index
    %c0_1 = arith.constant 0 : index
    %c0_2 = arith.constant 0 : index
    %3 = vector.load %arg2[%c0, %c0_1, %c0_2] : memref<1x16x32xf32, #tpu.memory_space<vmem>>, vector<1x16x32xf32>
    %4 = vector.shape_cast %3 : vector<1x16x32xf32> to vector<16x32xf32>
    %c0_3 = arith.constant 0 : index
    %c0_4 = arith.constant 0 : index
    %5 = vector.load %arg4[%c0_3, %c0_4] : memref<32x32xf32, #tpu.memory_space<vmem>>, vector<32x32xf32>
    %cst = arith.constant dense<0.000000e+00> : vector<16x32xf32>
    %6 = tpu.matmul %4, %5, %cst {dimension_numbers = #tpu.dot_dimension_numbers<[1], [0], [0], [1], [0, 0, 1, 1], [], []>} : vector<16x32xf32>, vector<32x32xf32>, vector<16x32xf32> -> vector<16x32xf32>
    %c0_5 = arith.constant 0 : index
    %c0_6 = arith.constant 0 : index
    %7 = vector.load %arg5[%c0_5, %c0_6] : memref<1x32xf32, #tpu.memory_space<vmem>>, vector<1x32xf32>
    %8 = vector.broadcast %7 : vector<1x32xf32> to vector<16x32xf32>
    %9 = arith.addf %6, %8 : vector<16x32xf32>
    %cst_7 = arith.constant 0.353553385 : f32
    %10 = vector.broadcast %cst_7 : f32 to vector<16x32xf32>
    %11 = arith.mulf %9, %10 : vector<16x32xf32>
    %12 = vector.extract_strided_slice %11 {offsets = [0, 0], sizes = [16, 8], strides = [1, 1]} : vector<16x32xf32> to vector<16x8xf32>
    %c0_8 = arith.constant 0 : index
    %c0_9 = arith.constant 0 : index
    %c0_10 = arith.constant 0 : index
    %13 = vector.load %arg15[%c0_8, %c0_9, %c0_10] : memref<4x16x8xf32, #tpu.memory_space<vmem>>, vector<1x16x8xf32>
    %14 = vector.shape_cast %13 : vector<1x16x8xf32> to vector<16x8xf32>
    %15 = vector.shape_cast %12 : vector<16x8xf32> to vector<1x16x8xf32>
    tpu.vector_store %arg15[%c0_8, %c0_9, %c0_10], %15 {strides = array<i32>} : memref<4x16x8xf32, #tpu.memory_space<vmem>>, vector<1x16x8xf32>,
    %16 = vector.extract_strided_slice %11 {offsets = [0, 8], sizes = [16, 8], strides = [1, 1]} : vector<16x32xf32> to vector<16x8xf32>
    %c1 = arith.constant 1 : index
    %c0_11 = arith.constant 0 : index
    %c0_12 = arith.constant 0 : index
    %17 = vector.load %arg15[%c1, %c0_11, %c0_12] : memref<4x16x8xf32, #tpu.memory_space<vmem>>, vector<1x16x8xf32>
    %18 = vector.shape_cast %17 : vector<1x16x8xf32> to vector<16x8xf32>
    %19 = vector.shape_cast %16 : vector<16x8xf32> to vector<1x16x8xf32>
    tpu.vector_store %arg15[%c1, %c0_11, %c0_12], %19 {strides = array<i32>} : memref<4x16x8xf32, #tpu.memory_space<vmem>>, vector<1x16x8xf32>,
    %20 = vector.extract_strided_slice %11 {offsets = [0, 16], sizes = [16, 8], strides = [1, 1]} : vector<16x32xf32> to vector<16x8xf32>
    %c2 = arith.constant 2 : index
    %c0_13 = arith.constant 0 : index
    %c0_14 = arith.constant 0 : index
    %21 = vector.load %arg15[%c2, %c0_13, %c0_14] : memref<4x16x8xf32, #tpu.memory_space<vmem>>, vector<1x16x8xf32>
    %22 = vector.shape_cast %21 : vector<1x16x8xf32> to vector<16x8xf32>
    %23 = vector.shape_cast %20 : vector<16x8xf32> to vector<1x16x8xf32>
    tpu.vector_store %arg15[%c2, %c0_13, %c0_14], %23 {strides = array<i32>} : memref<4x16x8xf32, #tpu.memory_space<vmem>>, vector<1x16x8xf32>,
    %24 = vector.extract_strided_slice %11 {offsets = [0, 24], sizes = [16, 8], strides = [1, 1]} : vector<16x32xf32> to vector<16x8xf32>
    %c3 = arith.constant 3 : index
    %c0_15 = arith.constant 0 : index
    %c0_16 = arith.constant 0 : index
    %25 = vector.load %arg15[%c3, %c0_15, %c0_16] : memref<4x16x8xf32, #tpu.memory_space<vmem>>, vector<1x16x8xf32>
    %26 = vector.shape_cast %25 : vector<1x16x8xf32> to vector<16x8xf32>
    %27 = vector.shape_cast %24 : vector<16x8xf32> to vector<1x16x8xf32>
    tpu.vector_store %arg15[%c3, %c0_15, %c0_16], %27 {strides = array<i32>} : memref<4x16x8xf32, #tpu.memory_space<vmem>>, vector<1x16x8xf32>,
    %c0_17 = arith.constant 0 : index
    %c0_18 = arith.constant 0 : index
    %c0_19 = arith.constant 0 : index
    %28 = vector.load %arg15[%c0_17, %c0_18, %c0_19] : memref<4x16x8xf32, #tpu.memory_space<vmem>>, vector<4x16x8xf32>
    %c0_20 = arith.constant 0 : index
    %c0_21 = arith.constant 0 : index
    %c0_22 = arith.constant 0 : index
    %29 = vector.load %arg13[%c0_20, %c0_21, %c0_22] : memref<4x16x8xf32, #tpu.memory_space<vmem>>, vector<4x16x8xf32>
    %c0_23 = arith.constant 0 : index
    %c0_24 = arith.constant 0 : index
    %c0_25 = arith.constant 0 : index
    %30 = vector.load %arg14[%c0_23, %c0_24, %c0_25] : memref<4x16x8xf32, #tpu.memory_space<vmem>>, vector<4x16x8xf32>
    "tpu.trace_start"() <{level = 10 : i32, message = "hqd,hkd->hqk"}> : () -> ()
    %cst_26 = arith.constant dense<0.000000e+00> : vector<4x16x16xf32>
    %31 = tpu.matmul %28, %29, %cst_26 {dimension_numbers = #tpu.dot_dimension_numbers<[2], [2], [1], [1], [0, 0, 0, 1, 1, 1], [0], [0]>} : vector<4x16x8xf32>, vector<4x16x8xf32>, vector<4x16x16xf32> -> vector<4x16x16xf32>
    "tpu.trace_stop"() : () -> ()
    %cst_27 = arith.constant dense<0xFF800000> : vector<4x16xf32>
    %32 = vector.multi_reduction <maximumf>, %31, %cst_27 [2] : vector<4x16x16xf32> to vector<4x16xf32>
    %33 = vector.shape_cast %32 : vector<4x16xf32> to vector<4x16x1xf32>
    %34 = vector.broadcast %33 : vector<4x16x1xf32> to vector<4x16x16xf32>
    %35 = arith.subf %31, %34 : vector<4x16x16xf32>
    %36 = math.exp %35 : vector<4x16x16xf32>
    %cst_28 = arith.constant dense<0.000000e+00> : vector<4x16xf32>
    %37 = vector.multi_reduction <add>, %36, %cst_28 [2] : vector<4x16x16xf32> to vector<4x16xf32>
    %38 = vector.shape_cast %37 : vector<4x16xf32> to vector<4x16x1xf32>
    "tpu.trace_start"() <{level = 10 : i32, message = "hqk,hkd->hqd"}> : () -> ()
    %cst_29 = arith.constant dense<0.000000e+00> : vector<4x16x8xf32>
    %39 = tpu.matmul %36, %30, %cst_29 {dimension_numbers = #tpu.dot_dimension_numbers<[2], [1], [1], [2], [0, 0, 0, 1, 1, 2], [0], [0]>} : vector<4x16x16xf32>, vector<4x16x8xf32>, vector<4x16x8xf32> -> vector<4x16x8xf32>
    "tpu.trace_stop"() : () -> ()
    %40 = tpu.reciprocal %38 {approx = true} : vector<4x16x1xf32> -> vector<4x16x1xf32>
    %41 = vector.broadcast %40 : vector<4x16x1xf32> to vector<4x16x8xf32>
    %42 = arith.mulf %39, %41 : vector<4x16x8xf32>
    %43 = vector.extract_strided_slice %42 {offsets = [0, 0, 0], sizes = [1, 16, 8], strides = [1, 1, 1]} : vector<4x16x8xf32> to vector<1x16x8xf32>
    %44 = vector.shape_cast %43 : vector<1x16x8xf32> to vector<16x8xf32>
    %c0_30 = arith.constant 0 : index
    %c0_31 = arith.constant 0 : index
    %45 = vector.load %arg16[%c0_30, %c0_31] : memref<16x32xf32, #tpu.memory_space<vmem>>, vector<16x8xf32>
    tpu.vector_store %arg16[%c0_30, %c0_31], %44 {strides = array<i32>} : memref<16x32xf32, #tpu.memory_space<vmem>>, vector<16x8xf32>,
    %46 = vector.extract_strided_slice %42 {offsets = [1, 0, 0], sizes = [1, 16, 8], strides = [1, 1, 1]} : vector<4x16x8xf32> to vector<1x16x8xf32>
    %47 = vector.shape_cast %46 : vector<1x16x8xf32> to vector<16x8xf32>
    %c0_32 = arith.constant 0 : index
    %c8 = arith.constant 8 : index
    %48 = vector.load %arg16[%c0_32, %c8] : memref<16x32xf32, #tpu.memory_space<vmem>>, vector<16x8xf32>
    tpu.vector_store %arg16[%c0_32, %c8], %47 {strides = array<i32>} : memref<16x32xf32, #tpu.memory_space<vmem>>, vector<16x8xf32>,
    %49 = vector.extract_strided_slice %42 {offsets = [2, 0, 0], sizes = [1, 16, 8], strides = [1, 1, 1]} : vector<4x16x8xf32> to vector<1x16x8xf32>
    %50 = vector.shape_cast %49 : vector<1x16x8xf32> to vector<16x8xf32>
    %c0_33 = arith.constant 0 : index
    %c16 = arith.constant 16 : index
    %51 = vector.load %arg16[%c0_33, %c16] : memref<16x32xf32, #tpu.memory_space<vmem>>, vector<16x8xf32>
    tpu.vector_store %arg16[%c0_33, %c16], %50 {strides = array<i32>} : memref<16x32xf32, #tpu.memory_space<vmem>>, vector<16x8xf32>,
    %52 = vector.extract_strided_slice %42 {offsets = [3, 0, 0], sizes = [1, 16, 8], strides = [1, 1, 1]} : vector<4x16x8xf32> to vector<1x16x8xf32>
    %53 = vector.shape_cast %52 : vector<1x16x8xf32> to vector<16x8xf32>
    %c0_34 = arith.constant 0 : index
    %c24 = arith.constant 24 : index
    %54 = vector.load %arg16[%c0_34, %c24] : memref<16x32xf32, #tpu.memory_space<vmem>>, vector<16x8xf32>
    tpu.vector_store %arg16[%c0_34, %c24], %53 {strides = array<i32>} : memref<16x32xf32, #tpu.memory_space<vmem>>, vector<16x8xf32>,
    %c0_35 = arith.constant 0 : index
    %c0_36 = arith.constant 0 : index
    %55 = vector.load %arg16[%c0_35, %c0_36] : memref<16x32xf32, #tpu.memory_space<vmem>>, vector<16x32xf32>
    %c0_37 = arith.constant 0 : index
    %c0_38 = arith.constant 0 : index
    %56 = vector.load %arg10[%c0_37, %c0_38] : memref<32x32xf32, #tpu.memory_space<vmem>>, vector<32x32xf32>
    %cst_39 = arith.constant dense<0.000000e+00> : vector<16x32xf32>
    %57 = tpu.matmul %55, %56, %cst_39 {dimension_numbers = #tpu.dot_dimension_numbers<[1], [0], [0], [1], [0, 0, 1, 1], [], []>} : vector<16x32xf32>, vector<32x32xf32>, vector<16x32xf32> -> vector<16x32xf32>
    %c0_40 = arith.constant 0 : index
    %c0_41 = arith.constant 0 : index
    %58 = vector.load %arg11[%c0_40, %c0_41] : memref<1x32xf32, #tpu.memory_space<vmem>>, vector<1x32xf32>
    %59 = vector.broadcast %58 : vector<1x32xf32> to vector<16x32xf32>
    %60 = arith.addf %57, %59 : vector<16x32xf32>
    %c0_42 = arith.constant 0 : index
    %c0_43 = arith.constant 0 : index
    %c0_44 = arith.constant 0 : index
    %61 = vector.load %arg12[%c0_42, %c0_43, %c0_44] : memref<1x16x32xf32, #tpu.memory_space<vmem>>, vector<1x16x32xf32>
    %62 = vector.shape_cast %61 : vector<1x16x32xf32> to vector<16x32xf32>
    %63 = vector.shape_cast %60 : vector<16x32xf32> to vector<1x16x32xf32>
    tpu.vector_store %arg12[%c0_42, %c0_43, %c0_44], %63 {strides = array<i32>} : memref<1x16x32xf32, #tpu.memory_space<vmem>>, vector<1x16x32xf32>,
    return
  }
  func.func @transform_0(%arg0: i32, %arg1: i32) -> (i32, i32, i32) {
    %c0_i32 = arith.constant 0 : i32
    %c0_i32_0 = arith.constant 0 : i32
    return %arg0, %arg1, %c0_i32 : i32, i32, i32
  }
  func.func @transform_1(%arg0: i32, %arg1: i32) -> (i32, i32, i32) {
    %c0_i32 = arith.constant 0 : i32
    %c0_i32_0 = arith.constant 0 : i32
    %c0_i32_1 = arith.constant 0 : i32
    return %arg0, %c0_i32, %c0_i32_0 : i32, i32, i32
  }
  func.func @transform_2(%arg0: i32, %arg1: i32) -> (i32, i32) {
    %c0_i32 = arith.constant 0 : i32
    %c0_i32_0 = arith.constant 0 : i32
    %c0_i32_1 = arith.constant 0 : i32
    return %c0_i32, %c0_i32_0 : i32, i32
  }
  func.func @transform_3(%arg0: i32, %arg1: i32) -> (i32, i32) {
    %c0_i32 = arith.constant 0 : i32
    %c0_i32_0 = arith.constant 0 : i32
    %c0_i32_1 = arith.constant 0 : i32
    return %c0_i32, %c0_i32_0 : i32, i32
  }
  func.func @transform_4(%arg0: i32, %arg1: i32) -> (i32, i32) {
    %c0_i32 = arith.constant 0 : i32
    %c0_i32_0 = arith.constant 0 : i32
    %c0_i32_1 = arith.constant 0 : i32
    return %c0_i32, %c0_i32_0 : i32, i32
  }
  func.func @transform_5(%arg0: i32, %arg1: i32) -> (i32, i32) {
    %c0_i32 = arith.constant 0 : i32
    %c0_i32_0 = arith.constant 0 : i32
    %c0_i32_1 = arith.constant 0 : i32
    return %c0_i32, %c0_i32_0 : i32, i32
  }
  func.func @transform_6(%arg0: i32, %arg1: i32) -> (i32, i32) {
    %c0_i32 = arith.constant 0 : i32
    %c0_i32_0 = arith.constant 0 : i32
    %c0_i32_1 = arith.constant 0 : i32
    return %c0_i32, %c0_i32_0 : i32, i32
  }
  func.func @transform_7(%arg0: i32, %arg1: i32) -> (i32, i32) {
    %c0_i32 = arith.constant 0 : i32
    %c0_i32_0 = arith.constant 0 : i32
    %c0_i32_1 = arith.constant 0 : i32
    return %c0_i32, %c0_i32_0 : i32, i32
  }
  func.func @transform_8(%arg0: i32, %arg1: i32) -> (i32, i32) {
    %c0_i32 = arith.constant 0 : i32
    %c0_i32_0 = arith.constant 0 : i32
    %c0_i32_1 = arith.constant 0 : i32
    return %c0_i32, %c0_i32_0 : i32, i32
  }
  func.func @transform_9(%arg0: i32, %arg1: i32) -> (i32, i32) {
    %c0_i32 = arith.constant 0 : i32
    %c0_i32_0 = arith.constant 0 : i32
    %c0_i32_1 = arith.constant 0 : i32
    return %c0_i32, %c0_i32_0 : i32, i32
  }
  func.func @transform_10(%arg0: i32, %arg1: i32) -> (i32, i32, i32) {
    %c0_i32 = arith.constant 0 : i32
    %c0_i32_0 = arith.constant 0 : i32
    return %arg0, %arg1, %c0_i32 : i32, i32, i32
  }
}

</mosaic_0001>

<llo_original>
// kernel: tpu_custom_call.1
$region0: #{tpu_custom_call.1}
  #allocation0 [shape = 'u32[]', space=smem, size = 0x4, offset = 0x4, fixed_abs, tag = 'smem constant byte address 0x4 - core index']
  #allocation1 [shape = 'u32[72,128]{1,0:T(1,128)}', space=vmem, size = 0x9000, scoped, tag = 'internal scratch']
  #allocation2 [shape = 'f32[4,16,8]{2,1,0:T(8,128)}', space=vmem, size = 0x8000, scoped, tag = 'scratch operand']
  #allocation3 [shape = 'f32[4,16,8]{2,1,0:T(8,128)}', space=vmem, size = 0x8000, scoped, tag = 'scratch operand']
  #allocation4 [shape = 'f32[4,16,8]{2,1,0:T(8,128)}', space=vmem, size = 0x8000, scoped, tag = 'scratch operand']
  #allocation5 [shape = 'f32[16,32]{1,0:T(8,128)}', space=vmem, size = 0x2000, scoped, tag = 'scratch operand']
  %s0 = inlined_call_operand.hbm [shape: f32[2,16,32], index: 0, kind: input, shape index: {}]
  %s1 = inlined_call_operand.hbm [shape: f32[2,16,32], index: 1, kind: input, shape index: {}]
  %s2 = inlined_call_operand.hbm [shape: f32[32,32], index: 2, kind: input, shape index: {}]
  %s3 = inlined_call_operand.vmem [shape: f32[1,32], index: 3, kind: input, shape index: {}]
  %s4 = inlined_call_operand.hbm [shape: f32[32,32], index: 4, kind: input, shape index: {}]
  %s5 = inlined_call_operand.vmem [shape: f32[1,32], index: 5, kind: input, shape index: {}]
  %s6 = inlined_call_operand.hbm [shape: f32[32,32], index: 6, kind: input, shape index: {}]
  %s7 = inlined_call_operand.vmem [shape: f32[1,32], index: 7, kind: input, shape index: {}]
  %s8 = inlined_call_operand.hbm [shape: f32[32,32], index: 8, kind: input, shape index: {}]
  %s9 = inlined_call_operand.vmem [shape: f32[1,32], index: 9, kind: input, shape index: {}]
  %s10 = inlined_call_operand.hbm [shape: f32[2,16,32], index: 10, kind: output, shape index: {}]
  %s11 = sld [smem:[#allocation0]]
  $region101: #{tpu_custom_call.1} parent=0
    _
  %s13 = ssub.s32 1, %s11
  %s14 = scalar_select 0, %s13, %s11
  $region1: #{tpu_custom_call.1} parent=0
    #allocation6 [shape = 'u8[16384]{0}', space=vmem, size = 0x4000, scoped, tag = 'input window, operand 0']
    #allocation7 [shape = 's32[2]{0}', space=sflag, size = 0x8, scoped, tag = 'scoped memory for tpu_custom_call.1']
    #allocation8 [shape = 's32[2]{0}', space=sflag, size = 0x8, scoped, tag = 'scoped memory for tpu_custom_call.1']
    #allocation9 [shape = 'u8[16384]{0}', space=vmem, size = 0x4000, scoped, tag = 'input window, operand 1']
    #allocation10 [shape = 's32[2]{0}', space=sflag, size = 0x8, scoped, tag = 'scoped memory for tpu_custom_call.1']
    #allocation11 [shape = 'u8[16384]{0}', space=vmem, size = 0x4000, scoped, tag = 'input window, operand 2, single buffered']
    #allocation12 [shape = 'u8[16384]{0}', space=vmem, size = 0x4000, scoped, tag = 'input window, operand 4, single buffered']
    #allocation13 [shape = 's32[1]{0}', space=sflag, size = 0x4, scoped, tag = 'scoped memory for tpu_custom_call.1']
    #allocation14 [shape = 'u8[16384]{0}', space=vmem, size = 0x4000, scoped, tag = 'input window, operand 6, single buffered']
    #allocation15 [shape = 'u8[16384]{0}', space=vmem, size = 0x4000, scoped, tag = 'input window, operand 8, single buffered']
    #allocation16 [shape = 's32[1]{0}', space=sflag, size = 0x4, scoped, tag = 'scoped memory for tpu_custom_call.1']
    #allocation17 [shape = 'u8[16384]{0}', space=vmem, size = 0x4000, scoped, tag = 'output window, operand 0']
    %15 = vsyncpa [#allocation7], 0
    %s16 = scalar_lea.sflag [#allocation7], 1
    %17 = vsyncpa %s16, 0
    %18 = vsyncpa [#allocation10], 0
    %s19 = scalar_lea.sflag [#allocation10], 1
    %20 = vsyncpa %s19, 0
    %21 = vsyncpa [#allocation13], 0
    %22 = vsyncpa [#allocation16], 0
    %23 = vsyncpa [#allocation8], 0
    %s24 = scalar_lea.sflag [#allocation8], 1
    %25 = vsyncpa %s24, 0
    loop: start=0, step=1, limit=4
    $region2: #{tpu_custom_call.1} parent=1 // loop_pre_header
      _
    $region3: #{tpu_custom_call.1} parent=1 // loop_header
      %s27 = sphi 0, %s31
      %p28 = scmp.ge.s32.totalorder %s27, 4
      %s34 = sphi 0, %s46
      %s35 = sphi 0, %s42
      %s36 = sphi 0, %s34
      %s37 = sphi 0, %s35
      %s38 = sphi 0, %s36
      %s39 = sphi 0, %s37
      %s51 = sphi 0, %s53
      %s54 = sphi 0, %s51
      %s55 = sphi 0, %s54
      %s71 = sphi 0, %s55
      %s77 = sphi 0, %s79
      %s80 = sphi 0, %s77
      %s81 = sphi 0, %s80
      %s97 = sphi 0, %s81
      %s101 = sphi 0, %s101
      %s103 = sphi 0, %s101
      %s104 = sphi 0, %s103
      %s118 = sphi 0, %s104
      %s122 = sphi 0, %s122
      %s124 = sphi 0, %s122
      %s125 = sphi 0, %s124
      %s139 = sphi 0, %s125
      %s143 = sphi 0, %s143
      %s145 = sphi 0, %s143
      %s146 = sphi 0, %s145
      %s160 = sphi 0, %s146
      %s164 = sphi 0, %s164
      %s166 = sphi 0, %s164
      %s167 = sphi 0, %s166
      %s181 = sphi 0, %s167
      %s185 = sphi 0, %s185
      %s187 = sphi 0, %s185
      %s188 = sphi 0, %s187
      %s202 = sphi 0, %s188
      %s206 = sphi 0, %s206
      %s208 = sphi 0, %s206
      %s209 = sphi 0, %s208
      %s223 = sphi 0, %s209
      %s227 = sphi 0, %s227
      %s229 = sphi 0, %s227
      %s230 = sphi 0, %s229
      %s244 = sphi 0, %s230
      %s248 = sphi 0, %s248
      %s250 = sphi 0, %s248
      %s251 = sphi 0, %s250
      %s265 = sphi 0, %s251
      %s273 = sphi 0, %s275
      %s276 = sphi 0, %s273
      %s277 = sphi 0, %s276
      %s293 = sphi 0, %s277
    $region4: #{tpu_custom_call.1} parent=1 // loop_header_branch
      %30 = sbr.rel (%p28) target = $region8
    $region5: #{tpu_custom_call.1} parent=1 // loop_body
      %s32 = ssub.s32 %s27, 1
      %s33 = ssub.s32 %s27, 2
      %s40 = sadd.s32 1, %s35
      %p41 = scmp.ge.s32.totalorder %s40, 1
      %s42 = scalar_select %p41, 0, %s40
      %s43 = sadd.s32 1, %s34
      %s44 = scalar_select %p41, %s43, %s34
      %p45 = scmp.ge.s32.totalorder %s44, 2
      %s46 = scalar_select %p45, 0, %s44
      %s47 = ssub.s32 %s34, %s46
      %s48 = ssub.s32 %s35, %s42
      %s49 = sor.u32 %s47, %s48
      %p50 = scmp.eq.s32.totalorder %s49, 0
      %s52 = sadd.s32 %s51, 1
      %s53 = scalar_select %p50, %s51, %s52
      %p56 = pneg %p50
      %p57 = scmp.eq.s32.totalorder %s27, 1
      %p58 = por %p56, %p57
      %p59 = scmp.ne.s32.totalorder %s51, %s54
      %p60 = scmp.eq.s32.totalorder %s27, 0
      %p61 = por %p59, %p60
      %p62 = scmp.ne.s32.totalorder %s51, %s54
      %p63 = scmp.eq.s32.totalorder %s32, 1
      %p64 = por %p62, %p63
      %p65 = scmp.ne.s32.totalorder %s54, %s55
      %p66 = scmp.eq.s32.totalorder %s32, 0
      %p67 = por %p65, %p66
      %p68 = scmp.ne.s32.totalorder %s54, %s55
      %p69 = scmp.eq.s32.totalorder %s33, 1
      %p70 = por %p68, %p69
      %p72 = scmp.ne.s32.totalorder %s55, %s71
      %p73 = scmp.eq.s32.totalorder %s33, 0
      %p74 = por %p72, %p73
      %s75 = ssub.s32 %s34, %s46
      %p76 = scmp.eq.s32.totalorder %s75, 0
      %s78 = sadd.s32 %s77, 1
      %s79 = scalar_select %p76, %s77, %s78
      %p82 = pneg %p76
      %p83 = scmp.eq.s32.totalorder %s27, 1
      %p84 = por %p82, %p83
      %p85 = scmp.ne.s32.totalorder %s77, %s80
      %p86 = scmp.eq.s32.totalorder %s27, 0
      %p87 = por %p85, %p86
      %p88 = scmp.ne.s32.totalorder %s77, %s80
      %p89 = scmp.eq.s32.totalorder %s32, 1
      %p90 = por %p88, %p89
      %p91 = scmp.ne.s32.totalorder %s80, %s81
      %p92 = scmp.eq.s32.totalorder %s32, 0
      %p93 = por %p91, %p92
      %p94 = scmp.ne.s32.totalorder %s80, %s81
      %p95 = scmp.eq.s32.totalorder %s33, 1
      %p96 = por %p94, %p95
      %p98 = scmp.ne.s32.totalorder %s81, %s97
      %p99 = scmp.eq.s32.totalorder %s33, 0
      %p100 = por %p98, %p99
      %s102 = sadd.s32 %s101, 1
      %p105 = scmp.eq.s32.totalorder %s27, 1
      %p106 = scmp.ne.s32.totalorder %s101, %s103
      %p107 = scmp.eq.s32.totalorder %s27, 0
      %p108 = por %p106, %p107
      %p109 = scmp.ne.s32.totalorder %s101, %s103
      %p110 = scmp.eq.s32.totalorder %s32, 1
      %p111 = por %p109, %p110
      %p112 = scmp.ne.s32.totalorder %s103, %s104
      %p113 = scmp.eq.s32.totalorder %s32, 0
      %p114 = por %p112, %p113
      %p115 = scmp.ne.s32.totalorder %s103, %s104
      %p116 = scmp.eq.s32.totalorder %s33, 1
      %p117 = por %p115, %p116
      %p119 = scmp.ne.s32.totalorder %s104, %s118
      %p120 = scmp.eq.s32.totalorder %s33, 0
      %p121 = por %p119, %p120
      %s123 = sadd.s32 %s122, 1
      %p126 = scmp.eq.s32.totalorder %s27, 1
      %p127 = scmp.ne.s32.totalorder %s122, %s124
      %p128 = scmp.eq.s32.totalorder %s27, 0
      %p129 = por %p127, %p128
      %p130 = scmp.ne.s32.totalorder %s122, %s124
      %p131 = scmp.eq.s32.totalorder %s32, 1
      %p132 = por %p130, %p131
      %p133 = scmp.ne.s32.totalorder %s124, %s125
      %p134 = scmp.eq.s32.totalorder %s32, 0
      %p135 = por %p133, %p134
      %p136 = scmp.ne.s32.totalorder %s124, %s125
      %p137 = scmp.eq.s32.totalorder %s33, 1
      %p138 = por %p136, %p137
      %p140 = scmp.ne.s32.totalorder %s125, %s139
      %p141 = scmp.eq.s32.totalorder %s33, 0
      %p142 = por %p140, %p141
      %s144 = sadd.s32 %s143, 1
      %p147 = scmp.eq.s32.totalorder %s27, 1
      %p148 = scmp.ne.s32.totalorder %s143, %s145
      %p149 = scmp.eq.s32.totalorder %s27, 0
      %p150 = por %p148, %p149
      %p151 = scmp.ne.s32.totalorder %s143, %s145
      %p152 = scmp.eq.s32.totalorder %s32, 1
      %p153 = por %p151, %p152
      %p154 = scmp.ne.s32.totalorder %s145, %s146
      %p155 = scmp.eq.s32.totalorder %s32, 0
      %p156 = por %p154, %p155
      %p157 = scmp.ne.s32.totalorder %s145, %s146
      %p158 = scmp.eq.s32.totalorder %s33, 1
      %p159 = por %p157, %p158
      %p161 = scmp.ne.s32.totalorder %s146, %s160
      %p162 = scmp.eq.s32.totalorder %s33, 0
      %p163 = por %p161, %p162
      %s165 = sadd.s32 %s164, 1
      %p168 = scmp.eq.s32.totalorder %s27, 1
      %p169 = scmp.ne.s32.totalorder %s164, %s166
      %p170 = scmp.eq.s32.totalorder %s27, 0
      %p171 = por %p169, %p170
      %p172 = scmp.ne.s32.totalorder %s164, %s166
      %p173 = scmp.eq.s32.totalorder %s32, 1
      %p174 = por %p172, %p173
      %p175 = scmp.ne.s32.totalorder %s166, %s167
      %p176 = scmp.eq.s32.totalorder %s32, 0
      %p177 = por %p175, %p176
      %p178 = scmp.ne.s32.totalorder %s166, %s167
      %p179 = scmp.eq.s32.totalorder %s33, 1
      %p180 = por %p178, %p179
      %p182 = scmp.ne.s32.totalorder %s167, %s181
      %p183 = scmp.eq.s32.totalorder %s33, 0
      %p184 = por %p182, %p183
      %s186 = sadd.s32 %s185, 1
      %p189 = scmp.eq.s32.totalorder %s27, 1
      %p190 = scmp.ne.s32.totalorder %s185, %s187
      %p191 = scmp.eq.s32.totalorder %s27, 0
      %p192 = por %p190, %p191
      %p193 = scmp.ne.s32.totalorder %s185, %s187
      %p194 = scmp.eq.s32.totalorder %s32, 1
      %p195 = por %p193, %p194
      %p196 = scmp.ne.s32.totalorder %s187, %s188
      %p197 = scmp.eq.s32.totalorder %s32, 0
      %p198 = por %p196, %p197
      %p199 = scmp.ne.s32.totalorder %s187, %s188
      %p200 = scmp.eq.s32.totalorder %s33, 1
      %p201 = por %p199, %p200
      %p203 = scmp.ne.s32.totalorder %s188, %s202
      %p204 = scmp.eq.s32.totalorder %s33, 0
      %p205 = por %p203, %p204
      %s207 = sadd.s32 %s206, 1
      %p210 = scmp.eq.s32.totalorder %s27, 1
      %p211 = scmp.ne.s32.totalorder %s206, %s208
      %p212 = scmp.eq.s32.totalorder %s27, 0
      %p213 = por %p211, %p212
      %p214 = scmp.ne.s32.totalorder %s206, %s208
      %p215 = scmp.eq.s32.totalorder %s32, 1
      %p216 = por %p214, %p215
      %p217 = scmp.ne.s32.totalorder %s208, %s209
      %p218 = scmp.eq.s32.totalorder %s32, 0
      %p219 = por %p217, %p218
      %p220 = scmp.ne.s32.totalorder %s208, %s209
      %p221 = scmp.eq.s32.totalorder %s33, 1
      %p222 = por %p220, %p221
      %p224 = scmp.ne.s32.totalorder %s209, %s223
      %p225 = scmp.eq.s32.totalorder %s33, 0
      %p226 = por %p224, %p225
      %s228 = sadd.s32 %s227, 1
      %p231 = scmp.eq.s32.totalorder %s27, 1
      %p232 = scmp.ne.s32.totalorder %s227, %s229
      %p233 = scmp.eq.s32.totalorder %s27, 0
      %p234 = por %p232, %p233
      %p235 = scmp.ne.s32.totalorder %s227, %s229
      %p236 = scmp.eq.s32.totalorder %s32, 1
      %p237 = por %p235, %p236
      %p238 = scmp.ne.s32.totalorder %s229, %s230
      %p239 = scmp.eq.s32.totalorder %s32, 0
      %p240 = por %p238, %p239
      %p241 = scmp.ne.s32.totalorder %s229, %s230
      %p242 = scmp.eq.s32.totalorder %s33, 1
      %p243 = por %p241, %p242
      %p245 = scmp.ne.s32.totalorder %s230, %s244
      %p246 = scmp.eq.s32.totalorder %s33, 0
      %p247 = por %p245, %p246
      %s249 = sadd.s32 %s248, 1
      %p252 = scmp.eq.s32.totalorder %s27, 1
      %p253 = scmp.ne.s32.totalorder %s248, %s250
      %p254 = scmp.eq.s32.totalorder %s27, 0
      %p255 = por %p253, %p254
      %p256 = scmp.ne.s32.totalorder %s248, %s250
      %p257 = scmp.eq.s32.totalorder %s32, 1
      %p258 = por %p256, %p257
      %p259 = scmp.ne.s32.totalorder %s250, %s251
      %p260 = scmp.eq.s32.totalorder %s32, 0
      %p261 = por %p259, %p260
      %p262 = scmp.ne.s32.totalorder %s250, %s251
      %p263 = scmp.eq.s32.totalorder %s33, 1
      %p264 = por %p262, %p263
      %p266 = scmp.ne.s32.totalorder %s251, %s265
      %p267 = scmp.eq.s32.totalorder %s33, 0
      %p268 = por %p266, %p267
      %s269 = ssub.s32 %s34, %s46
      %s270 = ssub.s32 %s35, %s42
      %s271 = sor.u32 %s269, %s270
      %p272 = scmp.eq.s32.totalorder %s271, 0
      %s274 = sadd.s32 %s273, 1
      %s275 = scalar_select %p272, %s273, %s274
      %p278 = pneg %p272
      %p279 = scmp.eq.s32.totalorder %s27, 1
      %p280 = por %p278, %p279
      %p281 = scmp.ne.s32.totalorder %s273, %s276
      %p282 = scmp.eq.s32.totalorder %s27, 0
      %p283 = por %p281, %p282
      %p284 = scmp.ne.s32.totalorder %s273, %s276
      %p285 = scmp.eq.s32.totalorder %s32, 1
      %p286 = por %p284, %p285
      %p287 = scmp.ne.s32.totalorder %s276, %s277
      %p288 = scmp.eq.s32.totalorder %s32, 0
      %p289 = por %p287, %p288
      %p290 = scmp.ne.s32.totalorder %s276, %s277
      %p291 = scmp.eq.s32.totalorder %s33, 1
      %p292 = por %p290, %p291
      %p294 = scmp.ne.s32.totalorder %s277, %s293
      %p295 = scmp.eq.s32.totalorder %s33, 0
      %p296 = por %p294, %p295
      %p297 = scmp.le.s32.totalorder 1, %s27
      %p298 = scmp.lt.s32.totalorder %s27, 3
      %p299 = pnand %p297, %p298
      %p300 = pneg %p299
      // Predicated region
      $region9: #{tpu_custom_call.1} parent=5 // pred_check
        _
      $region10: #{tpu_custom_call.1} parent=5 // pred_check_branch
        %302 = sbr.rel (%p299) target = $region12
      $region11: #{tpu_custom_call.1} parent=5 // pred_region
        %s303 = ssub.s32 %s27, 1
        // Predicated region
        $region13: #{tpu_custom_call.1} parent=11 // pred_check
          %p304 = pneg %p114
        $region14: #{tpu_custom_call.1} parent=11 // pred_check_branch
          %306 = sbr.rel (%p304) target = $region16
        $region15: #{tpu_custom_call.1} parent=11 // pred_region
          %308 = vsyncadd [#allocation10], 0
          %s309 = sshll.u32 %s2, 4
          %s310 = int_to_ptr.hbm [resolvable:$true] %s309
          %s311 = sshll.u32 [#allocation11], 4
          %s312 = int_to_ptr.vmem [resolvable:$true] %s311
          %317 = dma.hbm_to_vmem [thread:$0]  %s310, 512, %s312, [#allocation10], 128, 128, 8
        $region16: #{tpu_custom_call.1} parent=11 // pred_fallthru
          _
        // Predicated region
        $region17: #{tpu_custom_call.1} parent=11 // pred_check
          %p318 = pneg %p135
        $region18: #{tpu_custom_call.1} parent=11 // pred_check_branch
          %320 = sbr.rel (%p318) target = $region20
        $region19: #{tpu_custom_call.1} parent=11 // pred_region
          _
        $region20: #{tpu_custom_call.1} parent=11 // pred_fallthru
          _
        // Predicated region
        $region21: #{tpu_custom_call.1} parent=11 // pred_check
          %p321 = pneg %p156
        $region22: #{tpu_custom_call.1} parent=11 // pred_check_branch
          %323 = sbr.rel (%p321) target = $region24
        $region23: #{tpu_custom_call.1} parent=11 // pred_region
          %325 = vsyncadd [#allocation13], 0
          %s326 = sshll.u32 %s4, 4
          %s327 = int_to_ptr.hbm [resolvable:$true] %s326
          %s328 = sshll.u32 [#allocation12], 4
          %s329 = int_to_ptr.vmem [resolvable:$true] %s328
          %334 = dma.hbm_to_vmem [thread:$0]  %s327, 512, %s329, [#allocation13], 128, 128, 8
        $region24: #{tpu_custom_call.1} parent=11 // pred_fallthru
          _
        // Predicated region
        $region25: #{tpu_custom_call.1} parent=11 // pred_check
          %p335 = pneg %p177
        $region26: #{tpu_custom_call.1} parent=11 // pred_check_branch
          %337 = sbr.rel (%p335) target = $region28
        $region27: #{tpu_custom_call.1} parent=11 // pred_region
          _
        $region28: #{tpu_custom_call.1} parent=11 // pred_fallthru
          _
        // Predicated region
        $region29: #{tpu_custom_call.1} parent=11 // pred_check
          %p338 = pneg %p198
        $region30: #{tpu_custom_call.1} parent=11 // pred_check_branch
          %340 = sbr.rel (%p338) target = $region32
        $region31: #{tpu_custom_call.1} parent=11 // pred_region
          %342 = vsyncadd [#allocation13], 0
          %s343 = sshll.u32 %s6, 4
          %s344 = int_to_ptr.hbm [resolvable:$true] %s343
          %s345 = sshll.u32 [#allocation14], 4
          %s346 = int_to_ptr.vmem [resolvable:$true] %s345
          %351 = dma.hbm_to_vmem [thread:$0]  %s344, 512, %s346, [#allocation13], 128, 128, 8
        $region32: #{tpu_custom_call.1} parent=11 // pred_fallthru
          _
        // Predicated region
        $region33: #{tpu_custom_call.1} parent=11 // pred_check
          %p352 = pneg %p219
        $region34: #{tpu_custom_call.1} parent=11 // pred_check_branch
          %354 = sbr.rel (%p352) target = $region36
        $region35: #{tpu_custom_call.1} parent=11 // pred_region
          _
        $region36: #{tpu_custom_call.1} parent=11 // pred_fallthru
          _
        // Predicated region
        $region37: #{tpu_custom_call.1} parent=11 // pred_check
          %p355 = pneg %p240
        $region38: #{tpu_custom_call.1} parent=11 // pred_check_branch
          %357 = sbr.rel (%p355) target = $region40
        $region39: #{tpu_custom_call.1} parent=11 // pred_region
          %359 = vsyncadd [#allocation16], 0
          %s360 = sshll.u32 %s8, 4
          %s361 = int_to_ptr.hbm [resolvable:$true] %s360
          %s362 = sshll.u32 [#allocation15], 4
          %s363 = int_to_ptr.vmem [resolvable:$true] %s362
          %368 = dma.hbm_to_vmem [thread:$0]  %s361, 512, %s363, [#allocation16], 128, 128, 8
        $region40: #{tpu_custom_call.1} parent=11 // pred_fallthru
          _
        // Predicated region
        $region41: #{tpu_custom_call.1} parent=11 // pred_check
          %p369 = pneg %p261
        $region42: #{tpu_custom_call.1} parent=11 // pred_check_branch
          %371 = sbr.rel (%p369) target = $region44
        $region43: #{tpu_custom_call.1} parent=11 // pred_region
          _
        $region44: #{tpu_custom_call.1} parent=11 // pred_fallthru
          _
      $region12: #{tpu_custom_call.1} parent=5 // pred_fallthru
        _
      %p372 = scmp.lt.s32.totalorder %s27, 2
      // Predicated region
      $region45: #{tpu_custom_call.1} parent=5 // pred_check
        %p373 = pneg %p372
      $region46: #{tpu_custom_call.1} parent=5 // pred_check_branch
        %375 = sbr.rel (%p373) target = $region48
      $region47: #{tpu_custom_call.1} parent=5 // pred_region
        // Predicated region
        $region49: #{tpu_custom_call.1} parent=47 // pred_check
          %p376 = pneg %p61
        $region50: #{tpu_custom_call.1} parent=47 // pred_check_branch
          %378 = sbr.rel (%p376) target = $region52
        $region51: #{tpu_custom_call.1} parent=47 // pred_region
          %s379 = sand.u32 %s51, 1
          %s380 = scalar_lea.sflag [#allocation7], %s379
          %s381 = sand.u32 %s51, 1
          %s382 = smul.addr %s381, 16
          %s383 = scalar_lea.vmem [#allocation6], %s382
          %s384 = smul.u32 2, %s35
          %386 = vsyncadd %s380, 0
          %s387 = smul.addr %s34, 2
          %s388 = sadd.s32 %s384, %s387
          %s389 = smul.addr %s388, 8
          %s390 = scalar_lea.hbm %s0, %s389
          %s391 = sshll.u32 %s390, 4
          %s392 = int_to_ptr.hbm [resolvable:$true] %s391
          %s393 = sshll.u32 %s383, 4
          %s394 = int_to_ptr.vmem [resolvable:$true] %s393
          %399 = dma.hbm_to_vmem [thread:$0]  %s392, 256, %s394, %s380, 128, 128, 8
        $region52: #{tpu_custom_call.1} parent=47 // pred_fallthru
          _
        // Predicated region
        $region53: #{tpu_custom_call.1} parent=47 // pred_check
          %p400 = pneg %p87
        $region54: #{tpu_custom_call.1} parent=47 // pred_check_branch
          %402 = sbr.rel (%p400) target = $region56
        $region55: #{tpu_custom_call.1} parent=47 // pred_region
          %s403 = sand.u32 %s27, 1
          %s404 = scalar_lea.sflag [#allocation10], %s403
          %s405 = sand.u32 %s77, 1
          %s406 = smul.addr %s405, 16
          %s407 = scalar_lea.vmem [#allocation9], %s406
          %409 = vsyncadd %s404, 0
          %s410 = smul.addr %s34, 2
          %s411 = smul.addr %s410, 8
          %s412 = scalar_lea.hbm %s1, %s411
          %s413 = sshll.u32 %s412, 4
          %s414 = int_to_ptr.hbm [resolvable:$true] %s413
          %s415 = sshll.u32 %s407, 4
          %s416 = int_to_ptr.vmem [resolvable:$true] %s415
          %421 = dma.hbm_to_vmem [thread:$0]  %s414, 256, %s416, %s404, 128, 128, 8
        $region56: #{tpu_custom_call.1} parent=47 // pred_fallthru
          _
      $region48: #{tpu_custom_call.1} parent=5 // pred_fallthru
        _
      %p422 = scmp.le.s32.totalorder 1, %s27
      %p423 = scmp.lt.s32.totalorder %s27, 3
      %p424 = pnand %p422, %p423
      %p425 = pneg %p424
      // Predicated region
      $region57: #{tpu_custom_call.1} parent=5 // pred_check
        _
      $region58: #{tpu_custom_call.1} parent=5 // pred_check_branch
        %427 = sbr.rel (%p424) target = $region60
      $region59: #{tpu_custom_call.1} parent=5 // pred_region
        %s428 = ssub.s32 %s27, 1
        %s429 = sand.u32 %s54, 1
        %s430 = scalar_lea.sflag [#allocation7], %s429
        %s431 = sand.u32 %s54, 1
        %s432 = smul.addr %s431, 16
        %s433 = scalar_lea.vmem [#allocation6], %s432
        // Predicated region
        $region61: #{tpu_custom_call.1} parent=59 // pred_check
          %p434 = pneg %p67
        $region62: #{tpu_custom_call.1} parent=59 // pred_check_branch
          %436 = sbr.rel (%p434) target = $region64
        $region63: #{tpu_custom_call.1} parent=59 // pred_region
          %438 = dma.done %s430, 256
        $region64: #{tpu_custom_call.1} parent=59 // pred_fallthru
          _
        %s439 = sand.u32 %s32, 1
        %s440 = scalar_lea.sflag [#allocation10], %s439
        %s441 = sand.u32 %s80, 1
        %s442 = smul.addr %s441, 16
        %s443 = scalar_lea.vmem [#allocation9], %s442
        // Predicated region
        $region65: #{tpu_custom_call.1} parent=59 // pred_check
          %p444 = pneg %p93
        $region66: #{tpu_custom_call.1} parent=59 // pred_check_branch
          %446 = sbr.rel (%p444) target = $region68
        $region67: #{tpu_custom_call.1} parent=59 // pred_region
          %448 = dma.done %s440, 256
        $region68: #{tpu_custom_call.1} parent=59 // pred_fallthru
          _
        // Predicated region
        $region69: #{tpu_custom_call.1} parent=59 // pred_check
          %p449 = pneg %p114
        $region70: #{tpu_custom_call.1} parent=59 // pred_check_branch
          %451 = sbr.rel (%p449) target = $region72
        $region71: #{tpu_custom_call.1} parent=59 // pred_region
          %453 = dma.done [#allocation10], 512
        $region72: #{tpu_custom_call.1} parent=59 // pred_fallthru
          _
        // Predicated region
        $region73: #{tpu_custom_call.1} parent=59 // pred_check
          %p454 = pneg %p156
        $region74: #{tpu_custom_call.1} parent=59 // pred_check_branch
          %456 = sbr.rel (%p454) target = $region76
        $region75: #{tpu_custom_call.1} parent=59 // pred_region
          %458 = dma.done [#allocation13], 512
        $region76: #{tpu_custom_call.1} parent=59 // pred_fallthru
          _
        // Predicated region
        $region77: #{tpu_custom_call.1} parent=59 // pred_check
          %p459 = pneg %p198
        $region78: #{tpu_custom_call.1} parent=59 // pred_check_branch
          %461 = sbr.rel (%p459) target = $region80
        $region79: #{tpu_custom_call.1} parent=59 // pred_region
          %463 = dma.done [#allocation13], 512
        $region80: #{tpu_custom_call.1} parent=59 // pred_fallthru
          _
        // Predicated region
        $region81: #{tpu_custom_call.1} parent=59 // pred_check
          %p464 = pneg %p240
        $region82: #{tpu_custom_call.1} parent=59 // pred_check_branch
          %466 = sbr.rel (%p464) target = $region84
        $region83: #{tpu_custom_call.1} parent=59 // pred_region
          %468 = dma.done [#allocation16], 512
        $region84: #{tpu_custom_call.1} parent=59 // pred_fallthru
          _
        %s469 = sand.u32 %s54, 1
        %s470 = scalar_lea.sflag [#allocation7], %s469
        %s471 = sand.u32 %s54, 1
        %s472 = smul.addr %s471, 16
        %s473 = scalar_lea.vmem [#allocation6], %s472
        %p474 = pneg %p67
        %p475 = pneg %p64
        %s476 = sand.u32 %s32, 1
        %s477 = scalar_lea.sflag [#allocation10], %s476
        %s478 = sand.u32 %s80, 1
        %s479 = smul.addr %s478, 16
        %s480 = scalar_lea.vmem [#allocation9], %s479
        %p481 = pneg %p93
        %p482 = pneg %p90
        %p483 = pneg %p114
        %p484 = pneg %p111
        %p485 = pneg %p135
        %p486 = pneg %p132
        %p487 = pneg %p156
        %p488 = pneg %p153
        %p489 = pneg %p177
        %p490 = pneg %p174
        %p491 = pneg %p198
        %p492 = pneg %p195
        %p493 = pneg %p219
        %p494 = pneg %p216
        %p495 = pneg %p240
        %p496 = pneg %p237
        %p497 = pneg %p261
        %p498 = pneg %p258
        %p499 = pneg %p289
        %p500 = pneg %p286
        %s501 = sand.u32 %s276, 1
        %s502 = scalar_lea.sflag [#allocation8], %s501
        %s503 = sand.u32 %s276, 1
        %s504 = smul.addr %s503, 16
        %s505 = scalar_lea.vmem [#allocation17], %s504
        %s506 = smul.u32 2, %s37
        %s507 = smul.u32 2, %s37
        %p508 = scmp.eq.s32.totalorder %s37, 0
        // Predicated region
        $region85: #{tpu_custom_call.1} parent=59 // pred_check
          %p509 = pneg %p508
        $region86: #{tpu_custom_call.1} parent=59 // pred_check_branch
          %511 = sbr.rel (%p509) target = $region88
        $region87: #{tpu_custom_call.1} parent=59 // pred_region
          %v512 = vld [vmem:[%s443] sm:$0xff]
          %v513 = vld [vmem:[%s443 + $0x8] sm:$0xff]
          %v514 = vld [vmem:[#allocation12] sm:$0xff]
          %v515 = vld [vmem:[#allocation12 + $0x8] sm:$0xff]
          %v516 = vld [vmem:[#allocation12 + $0x10] sm:$0xff]
          %v517 = vld [vmem:[#allocation12 + $0x18] sm:$0xff]
          %v518 = vld [vmem:[%s5] sm:$0x1]
          %v520 = vperm.slane %v518, 0
          %vm522 = vcmask 261120
          %v524 = vsel %vm522, %v512, 0
          %v527 = vsel %vm522, %v513, 0
          %529 = vmatpush.msra.mxu0 0.0
          %530 = vmatpush.msra.mxu0 0.0
          %531 = vmatpush.msra.mxu0 0.0
          %532 = vmatpush.msra.mxu0 0.0
          %533 = vmatpush.msra.mxu0 0.0
          %534 = vmatpush.msra.mxu0 0.0
          %535 = vmatpush.msra.mxu0 0.0
          %536 = vmatpush.msra.mxu0 0.0
          %537 = vmatpush.msra.mxu0 0.0
          %538 = vmatpush.msra.mxu0 0.0
          %539 = vmatpush.msra.mxu0 0.0
          %540 = vmatpush.msra.mxu0 0.0
          %541 = vmatpush.msra.mxu0 %v517
          %542 = vmatpush.msra.mxu0 %v516
          %543 = vmatpush.msra.mxu0 %v515
          %544 = vmatpush.msra.mxu0 %v514
          %545 = vmatmul.f32.gmra.mxu0 %v524
          %v546 = vpop.f32.mrf.mxu0
          %v547 = vadd.f32 %v520, %v546
          %548 = vmatmul.f32.gmra.mxu0 %v527
          %v549 = vpop.f32.mrf.mxu0
          %v550 = vadd.f32 %v520, %v549
          %551 = vdwg.mxu0
          %v552 = vld [vmem:[#allocation14] sm:$0xff]
          %v553 = vld [vmem:[#allocation14 + $0x8] sm:$0xff]
          %v554 = vld [vmem:[#allocation14 + $0x10] sm:$0xff]
          %v555 = vld [vmem:[#allocation14 + $0x18] sm:$0xff]
          %v556 = vld [vmem:[%s7] sm:$0x1]
          %v558 = vperm.slane %v556, 0
          %560 = vmatpush.msra.mxu0 0.0
          %561 = vmatpush.msra.mxu0 0.0
          %562 = vmatpush.msra.mxu0 0.0
          %563 = vmatpush.msra.mxu0 0.0
          %564 = vmatpush.msra.mxu0 0.0
          %565 = vmatpush.msra.mxu0 0.0
          %566 = vmatpush.msra.mxu0 0.0
          %567 = vmatpush.msra.mxu0 0.0
          %568 = vmatpush.msra.mxu0 0.0
          %569 = vmatpush.msra.mxu0 0.0
          %570 = vmatpush.msra.mxu0 0.0
          %571 = vmatpush.msra.mxu0 0.0
          %572 = vmatpush.msra.mxu0 %v555
          %573 = vmatpush.msra.mxu0 %v554
          %574 = vmatpush.msra.mxu0 %v553
          %575 = vmatpush.msra.mxu0 %v552
          %576 = vmatmul.f32.gmra.mxu0 %v524
          %v577 = vpop.f32.mrf.mxu0
          %v578 = vadd.f32 %v558, %v577
          %579 = vmatmul.f32.gmra.mxu0 %v527
          %v580 = vpop.f32.mrf.mxu0
          %v581 = vadd.f32 %v558, %v580
          %582 = vdwg.mxu0
          %vm583 = vcmask 64512
          %584 = vst.msk [vmem:[#allocation2] sm:$0xff] %vm583, %v547
          %585 = vst.msk [vmem:[#allocation2 + $0x8] sm:$0xff] %vm583, %v550
          %586 = vst.msk [vmem:[#allocation3] sm:$0xff] %vm583, %v578
          %587 = vst.msk [vmem:[#allocation3 + $0x8] sm:$0xff] %vm583, %v581
          %590 = vrot.lane.b32.xlu0 %v547, 120
          %v591 = vpop.permute.xlu0 %590
          %592 = vrot.lane.b32.xlu0 %v550, 120
          %v593 = vpop.permute.xlu0 %592
          %s596 = scalar_lea.vmem [#allocation2], 16
          %597 = vst.msk [vmem:[%s596] sm:$0xff] %vm583, %v591
          %598 = vst.msk [vmem:[%s596 + $0x8] sm:$0xff] %vm583, %v593
          %601 = vrot.lane.b32.xlu0 %v578, 120
          %v602 = vpop.permute.xlu0 %601
          %603 = vrot.lane.b32.xlu0 %v581, 120
          %v604 = vpop.permute.xlu0 %603
          %s607 = scalar_lea.vmem [#allocation3], 16
          %608 = vst.msk [vmem:[%s607] sm:$0xff] %vm583, %v602
          %609 = vst.msk [vmem:[%s607 + $0x8] sm:$0xff] %vm583, %v604
          %610 = vrot.lane.b32.xlu0 %v547, 112
          %v611 = vpop.permute.xlu0 %610
          %612 = vrot.lane.b32.xlu0 %v550, 112
          %v613 = vpop.permute.xlu0 %612
          %s616 = scalar_lea.vmem [#allocation2], 32
          %617 = vst.msk [vmem:[%s616] sm:$0xff] %vm583, %v611
          %618 = vst.msk [vmem:[%s616 + $0x8] sm:$0xff] %vm583, %v613
          %619 = vrot.lane.b32.xlu0 %v578, 112
          %v620 = vpop.permute.xlu0 %619
          %621 = vrot.lane.b32.xlu0 %v581, 112
          %v622 = vpop.permute.xlu0 %621
          %s625 = scalar_lea.vmem [#allocation3], 32
          %626 = vst.msk [vmem:[%s625] sm:$0xff] %vm583, %v620
          %627 = vst.msk [vmem:[%s625 + $0x8] sm:$0xff] %vm583, %v622
          %628 = vrot.lane.b32.xlu0 %v547, 104
          %v629 = vpop.permute.xlu0 %628
          %630 = vrot.lane.b32.xlu0 %v550, 104
          %v631 = vpop.permute.xlu0 %630
          %s634 = scalar_lea.vmem [#allocation2], 48
          %635 = vst.msk [vmem:[%s634] sm:$0xff] %vm583, %v629
          %636 = vst.msk [vmem:[%s634 + $0x8] sm:$0xff] %vm583, %v631
          %637 = vrot.lane.b32.xlu0 %v578, 104
          %v638 = vpop.permute.xlu0 %637
          %639 = vrot.lane.b32.xlu0 %v581, 104
          %v640 = vpop.permute.xlu0 %639
          %s643 = scalar_lea.vmem [#allocation3], 48
          %644 = vst.msk [vmem:[%s643] sm:$0xff] %vm583, %v638
          %645 = vst.msk [vmem:[%s643 + $0x8] sm:$0xff] %vm583, %v640
        $region88: #{tpu_custom_call.1} parent=59 // pred_fallthru
          _
        %v646 = vld [vmem:[%s433] sm:$0xff]
        %v647 = vld [vmem:[%s433 + $0x8] sm:$0xff]
        %v648 = vld [vmem:[#allocation11] sm:$0xff]
        %v649 = vld [vmem:[#allocation11 + $0x8] sm:$0xff]
        %v650 = vld [vmem:[#allocation11 + $0x10] sm:$0xff]
        %v651 = vld [vmem:[#allocation11 + $0x18] sm:$0xff]
        %v652 = vld [vmem:[%s3] sm:$0x1]
        %v654 = vperm.slane %v652, 0
        %vm656 = vcmask 261120
        %v658 = vsel %vm656, %v646, 0
        %v661 = vsel %vm656, %v647, 0
        %663 = vmatpush.msra.mxu0 0.0
        %664 = vmatpush.msra.mxu0 0.0
        %665 = vmatpush.msra.mxu0 0.0
        %666 = vmatpush.msra.mxu0 0.0
        %667 = vmatpush.msra.mxu0 0.0
        %668 = vmatpush.msra.mxu0 0.0
        %669 = vmatpush.msra.mxu0 0.0
        %670 = vmatpush.msra.mxu0 0.0
        %671 = vmatpush.msra.mxu0 0.0
        %672 = vmatpush.msra.mxu0 0.0
        %673 = vmatpush.msra.mxu0 0.0
        %674 = vmatpush.msra.mxu0 0.0
        %675 = vmatpush.msra.mxu0 %v651
        %676 = vmatpush.msra.mxu0 %v650
        %677 = vmatpush.msra.mxu0 %v649
        %678 = vmatpush.msra.mxu0 %v648
        %679 = vmatmul.f32.gmra.mxu0 %v658
        %v680 = vpop.f32.mrf.mxu0
        %v681 = vadd.f32 %v654, %v680
        %682 = vmatmul.f32.gmra.mxu0 %v661
        %v683 = vpop.f32.mrf.mxu0
        %v684 = vadd.f32 %v654, %v683
        %685 = vdwg.mxu0
        %v686 = vmul.f32 %v681, 0.35355338
        %v687 = vmul.f32 %v684, 0.35355338
        %vm688 = vcmask 64512
        %689 = vst.msk [vmem:[#allocation4] sm:$0xff] %vm688, %v686
        %690 = vst.msk [vmem:[#allocation4 + $0x8] sm:$0xff] %vm688, %v687
        %693 = vrot.lane.b32.xlu0 %v686, 120
        %v694 = vpop.permute.xlu0 %693
        %695 = vrot.lane.b32.xlu0 %v687, 120
        %v696 = vpop.permute.xlu0 %695
        %s699 = scalar_lea.vmem [#allocation4], 16
        %700 = vst.msk [vmem:[%s699] sm:$0xff] %vm688, %v694
        %701 = vst.msk [vmem:[%s699 + $0x8] sm:$0xff] %vm688, %v696
        %702 = vrot.lane.b32.xlu0 %v686, 112
        %v703 = vpop.permute.xlu0 %702
        %704 = vrot.lane.b32.xlu0 %v687, 112
        %v705 = vpop.permute.xlu0 %704
        %s708 = scalar_lea.vmem [#allocation4], 32
        %709 = vst.msk [vmem:[%s708] sm:$0xff] %vm688, %v703
        %710 = vst.msk [vmem:[%s708 + $0x8] sm:$0xff] %vm688, %v705
        %711 = vrot.lane.b32.xlu0 %v686, 104
        %v712 = vpop.permute.xlu0 %711
        %713 = vrot.lane.b32.xlu0 %v687, 104
        %v714 = vpop.permute.xlu0 %713
        %s717 = scalar_lea.vmem [#allocation4], 48
        %718 = vst.msk [vmem:[%s717] sm:$0xff] %vm688, %v712
        %719 = vst.msk [vmem:[%s717 + $0x8] sm:$0xff] %vm688, %v714
        %v720 = vld [vmem:[#allocation4] sm:$0xff]
        %v721 = vld [vmem:[#allocation4 + $0x8] sm:$0xff]
        %v722 = vld [vmem:[#allocation4 + $0x10] sm:$0xff]
        %v723 = vld [vmem:[#allocation4 + $0x18] sm:$0xff]
        %v724 = vld [vmem:[#allocation4 + $0x20] sm:$0xff]
        %v725 = vld [vmem:[#allocation4 + $0x28] sm:$0xff]
        %v726 = vld [vmem:[#allocation4 + $0x30] sm:$0xff]
        %v727 = vld [vmem:[#allocation4 + $0x38] sm:$0xff]
        %v728 = vld [vmem:[#allocation2] sm:$0xff]
        %v729 = vld [vmem:[#allocation2 + $0x8] sm:$0xff]
        %v730 = vld [vmem:[#allocation2 + $0x10] sm:$0xff]
        %v731 = vld [vmem:[#allocation2 + $0x18] sm:$0xff]
        %v732 = vld [vmem:[#allocation2 + $0x20] sm:$0xff]
        %v733 = vld [vmem:[#allocation2 + $0x28] sm:$0xff]
        %v734 = vld [vmem:[#allocation2 + $0x30] sm:$0xff]
        %v735 = vld [vmem:[#allocation2 + $0x38] sm:$0xff]
        %v736 = vld [vmem:[#allocation3] sm:$0xff]
        %v737 = vld [vmem:[#allocation3 + $0x8] sm:$0xff]
        %v738 = vld [vmem:[#allocation3 + $0x10] sm:$0xff]
        %v739 = vld [vmem:[#allocation3 + $0x18] sm:$0xff]
        %v740 = vld [vmem:[#allocation3 + $0x20] sm:$0xff]
        %v741 = vld [vmem:[#allocation3 + $0x28] sm:$0xff]
        %v742 = vld [vmem:[#allocation3 + $0x30] sm:$0xff]
        %v743 = vld [vmem:[#allocation3 + $0x38] sm:$0xff]
        %v745 = vsel %vm688, %v720, 0
        %v748 = vsel %vm688, %v721, 0
        %v751 = vsel %vm688, %v728, 0
        %v754 = vsel %vm688, %v729, 0
        %756 = vmatpush.xpose.msra.mxu0 0.0
        %757 = vmatpush.xpose.msra.mxu0 0.0
        %758 = vmatpush.xpose.msra.mxu0 0.0
        %759 = vmatpush.xpose.msra.mxu0 0.0
        %760 = vmatpush.xpose.msra.mxu0 0.0
        %761 = vmatpush.xpose.msra.mxu0 0.0
        %762 = vmatpush.xpose.msra.mxu0 0.0
        %763 = vmatpush.xpose.msra.mxu0 0.0
        %764 = vmatpush.xpose.msra.mxu0 0.0
        %765 = vmatpush.xpose.msra.mxu0 0.0
        %766 = vmatpush.xpose.msra.mxu0 0.0
        %767 = vmatpush.xpose.msra.mxu0 0.0
        %768 = vmatpush.xpose.msra.mxu0 0.0
        %769 = vmatpush.xpose.msra.mxu0 0.0
        %770 = vmatpush.xpose.msra.mxu0 %v754
        %771 = vmatpush.xpose.msra.mxu0 %v751
        %772 = vmatmul.f32.gmra.mxu0 %v745
        %v773 = vpop.f32.mrf.mxu0
        %v774 = vadd.f32 0.0, %v773
        %775 = vmatmul.f32.gmra.mxu0 %v748
        %v776 = vpop.f32.mrf.mxu0
        %v777 = vadd.f32 0.0, %v776
        %778 = vdwg.mxu0
        %v780 = vsel %vm688, %v722, 0
        %v783 = vsel %vm688, %v723, 0
        %v786 = vsel %vm688, %v730, 0
        %v789 = vsel %vm688, %v731, 0
        %791 = vmatpush.xpose.msra.mxu0 0.0
        %792 = vmatpush.xpose.msra.mxu0 0.0
        %793 = vmatpush.xpose.msra.mxu0 0.0
        %794 = vmatpush.xpose.msra.mxu0 0.0
        %795 = vmatpush.xpose.msra.mxu0 0.0
        %796 = vmatpush.xpose.msra.mxu0 0.0
        %797 = vmatpush.xpose.msra.mxu0 0.0
        %798 = vmatpush.xpose.msra.mxu0 0.0
        %799 = vmatpush.xpose.msra.mxu0 0.0
        %800 = vmatpush.xpose.msra.mxu0 0.0
        %801 = vmatpush.xpose.msra.mxu0 0.0
        %802 = vmatpush.xpose.msra.mxu0 0.0
        %803 = vmatpush.xpose.msra.mxu0 0.0
        %804 = vmatpush.xpose.msra.mxu0 0.0
        %805 = vmatpush.xpose.msra.mxu0 %v789
        %806 = vmatpush.xpose.msra.mxu0 %v786
        %807 = vmatmul.f32.gmra.mxu0 %v780
        %v808 = vpop.f32.mrf.mxu0
        %v809 = vadd.f32 0.0, %v808
        %810 = vmatmul.f32.gmra.mxu0 %v783
        %v811 = vpop.f32.mrf.mxu0
        %v812 = vadd.f32 0.0, %v811
        %813 = vdwg.mxu0
        %v815 = vsel %vm688, %v724, 0
        %v818 = vsel %vm688, %v725, 0
        %v821 = vsel %vm688, %v732, 0
        %v824 = vsel %vm688, %v733, 0
        %826 = vmatpush.xpose.msra.mxu0 0.0
        %827 = vmatpush.xpose.msra.mxu0 0.0
        %828 = vmatpush.xpose.msra.mxu0 0.0
        %829 = vmatpush.xpose.msra.mxu0 0.0
        %830 = vmatpush.xpose.msra.mxu0 0.0
        %831 = vmatpush.xpose.msra.mxu0 0.0
        %832 = vmatpush.xpose.msra.mxu0 0.0
        %833 = vmatpush.xpose.msra.mxu0 0.0
        %834 = vmatpush.xpose.msra.mxu0 0.0
        %835 = vmatpush.xpose.msra.mxu0 0.0
        %836 = vmatpush.xpose.msra.mxu0 0.0
        %837 = vmatpush.xpose.msra.mxu0 0.0
        %838 = vmatpush.xpose.msra.mxu0 0.0
        %839 = vmatpush.xpose.msra.mxu0 0.0
        %840 = vmatpush.xpose.msra.mxu0 %v824
        %841 = vmatpush.xpose.msra.mxu0 %v821
        %842 = vmatmul.f32.gmra.mxu0 %v815
        %v843 = vpop.f32.mrf.mxu0
        %v844 = vadd.f32 0.0, %v843
        %845 = vmatmul.f32.gmra.mxu0 %v818
        %v846 = vpop.f32.mrf.mxu0
        %v847 = vadd.f32 0.0, %v846
        %848 = vdwg.mxu0
        %v850 = vsel %vm688, %v726, 0
        %v853 = vsel %vm688, %v727, 0
        %v856 = vsel %vm688, %v734, 0
        %v859 = vsel %vm688, %v735, 0
        %861 = vmatpush.xpose.msra.mxu0 0.0
        %862 = vmatpush.xpose.msra.mxu0 0.0
        %863 = vmatpush.xpose.msra.mxu0 0.0
        %864 = vmatpush.xpose.msra.mxu0 0.0
        %865 = vmatpush.xpose.msra.mxu0 0.0
        %866 = vmatpush.xpose.msra.mxu0 0.0
        %867 = vmatpush.xpose.msra.mxu0 0.0
        %868 = vmatpush.xpose.msra.mxu0 0.0
        %869 = vmatpush.xpose.msra.mxu0 0.0
        %870 = vmatpush.xpose.msra.mxu0 0.0
        %871 = vmatpush.xpose.msra.mxu0 0.0
        %872 = vmatpush.xpose.msra.mxu0 0.0
        %873 = vmatpush.xpose.msra.mxu0 0.0
        %874 = vmatpush.xpose.msra.mxu0 0.0
        %875 = vmatpush.xpose.msra.mxu0 %v859
        %876 = vmatpush.xpose.msra.mxu0 %v856
        %877 = vmatmul.f32.gmra.mxu0 %v850
        %v878 = vpop.f32.mrf.mxu0
        %v879 = vadd.f32 0.0, %v878
        %880 = vmatmul.f32.gmra.mxu0 %v853
        %v881 = vpop.f32.mrf.mxu0
        %v882 = vadd.f32 0.0, %v881
        %883 = vdwg.mxu0
        %vm884 = vcmask 130048
        %v885 = vsel %vm884, %v774, -inf
        %886 = vmax.xlane.f32.xlu0 %v885
        %v887 = vpop.xlane.xlu0 %886
        %v888 = vsel %vm884, %v777, -inf
        %889 = vmax.xlane.f32.xlu0 %v888
        %v890 = vpop.xlane.xlu0 %889
        %v891 = vsel %vm884, %v809, -inf
        %892 = vmax.xlane.f32.xlu0 %v891
        %v893 = vpop.xlane.xlu0 %892
        %v894 = vsel %vm884, %v812, -inf
        %895 = vmax.xlane.f32.xlu0 %v894
        %v896 = vpop.xlane.xlu0 %895
        %v897 = vsel %vm884, %v844, -inf
        %898 = vmax.xlane.f32.xlu0 %v897
        %v899 = vpop.xlane.xlu0 %898
        %v900 = vsel %vm884, %v847, -inf
        %901 = vmax.xlane.f32.xlu0 %v900
        %v902 = vpop.xlane.xlu0 %901
        %v903 = vsel %vm884, %v879, -inf
        %904 = vmax.xlane.f32.xlu0 %v903
        %v905 = vpop.xlane.xlu0 %904
        %v906 = vsel %vm884, %v882, -inf
        %907 = vmax.xlane.f32.xlu0 %v906
        %v908 = vpop.xlane.xlu0 %907
        %v909 = vsub.f32 %v774, %v887
        %v910 = vsub.f32 %v777, %v890
        %v911 = vsub.f32 %v809, %v893
        %v912 = vsub.f32 %v812, %v896
        %v913 = vsub.f32 %v844, %v899
        %v914 = vsub.f32 %v847, %v902
        %v915 = vsub.f32 %v879, %v905
        %v916 = vsub.f32 %v882, %v908
        %v917 = vmul.f32 %v909, 1.442695
        %v918 = vpow.pop %v917
        %v919 = vmul.f32 %v910, 1.442695
        %v920 = vpow.pop %v919
        %v921 = vmul.f32 %v911, 1.442695
        %v922 = vpow.pop %v921
        %v923 = vmul.f32 %v912, 1.442695
        %v924 = vpow.pop %v923
        %v925 = vmul.f32 %v913, 1.442695
        %v926 = vpow.pop %v925
        %v927 = vmul.f32 %v914, 1.442695
        %v928 = vpow.pop %v927
        %v929 = vmul.f32 %v915, 1.442695
        %v930 = vpow.pop %v929
        %v931 = vmul.f32 %v916, 1.442695
        %v932 = vpow.pop %v931
        %v933 = vsel %vm884, %v918, 0.0
        %934 = vadd.xlane.f32.xlu0 %v933
        %v935 = vpop.xlane.xlu0 %934
        %v936 = vsel %vm884, %v920, 0.0
        %937 = vadd.xlane.f32.xlu0 %v936
        %v938 = vpop.xlane.xlu0 %937
        %v939 = vsel %vm884, %v922, 0.0
        %940 = vadd.xlane.f32.xlu0 %v939
        %v941 = vpop.xlane.xlu0 %940
        %v942 = vsel %vm884, %v924, 0.0
        %943 = vadd.xlane.f32.xlu0 %v942
        %v944 = vpop.xlane.xlu0 %943
        %v945 = vsel %vm884, %v926, 0.0
        %946 = vadd.xlane.f32.xlu0 %v945
        %v947 = vpop.xlane.xlu0 %946
        %v948 = vsel %vm884, %v928, 0.0
        %949 = vadd.xlane.f32.xlu0 %v948
        %v950 = vpop.xlane.xlu0 %949
        %v951 = vsel %vm884, %v930, 0.0
        %952 = vadd.xlane.f32.xlu0 %v951
        %v953 = vpop.xlane.xlu0 %952
        %v954 = vsel %vm884, %v932, 0.0
        %955 = vadd.xlane.f32.xlu0 %v954
        %v956 = vpop.xlane.xlu0 %955
        %v958 = vsel %vm884, %v918, 0
        %v961 = vsel %vm884, %v920, 0
        %963 = vmatpush.msra.mxu0 0.0
        %964 = vmatpush.msra.mxu0 0.0
        %965 = vmatpush.msra.mxu0 0.0
        %966 = vmatpush.msra.mxu0 0.0
        %967 = vmatpush.msra.mxu0 0.0
        %968 = vmatpush.msra.mxu0 0.0
        %969 = vmatpush.msra.mxu0 0.0
        %970 = vmatpush.msra.mxu0 0.0
        %971 = vmatpush.msra.mxu0 0.0
        %972 = vmatpush.msra.mxu0 0.0
        %973 = vmatpush.msra.mxu0 0.0
        %974 = vmatpush.msra.mxu0 0.0
        %975 = vmatpush.msra.mxu0 0.0
        %976 = vmatpush.msra.mxu0 0.0
        %977 = vmatpush.msra.mxu0 %v737
        %978 = vmatpush.msra.mxu0 %v736
        %979 = vmatmul.f32.gmra.mxu0 %v958
        %v980 = vpop.f32.mrf.mxu0
        %v981 = vadd.f32 0.0, %v980
        %982 = vmatmul.f32.gmra.mxu0 %v961
        %v983 = vpop.f32.mrf.mxu0
        %v984 = vadd.f32 0.0, %v983
        %985 = vdwg.mxu0
        %v987 = vsel %vm884, %v922, 0
        %v990 = vsel %vm884, %v924, 0
        %992 = vmatpush.msra.mxu0 0.0
        %993 = vmatpush.msra.mxu0 0.0
        %994 = vmatpush.msra.mxu0 0.0
        %995 = vmatpush.msra.mxu0 0.0
        %996 = vmatpush.msra.mxu0 0.0
        %997 = vmatpush.msra.mxu0 0.0
        %998 = vmatpush.msra.mxu0 0.0
        %999 = vmatpush.msra.mxu0 0.0
        %1000 = vmatpush.msra.mxu0 0.0
        %1001 = vmatpush.msra.mxu0 0.0
        %1002 = vmatpush.msra.mxu0 0.0
        %1003 = vmatpush.msra.mxu0 0.0
        %1004 = vmatpush.msra.mxu0 0.0
        %1005 = vmatpush.msra.mxu0 0.0
        %1006 = vmatpush.msra.mxu0 %v739
        %1007 = vmatpush.msra.mxu0 %v738
        %1008 = vmatmul.f32.gmra.mxu0 %v987
        %v1009 = vpop.f32.mrf.mxu0
        %v1010 = vadd.f32 0.0, %v1009
        %1011 = vmatmul.f32.gmra.mxu0 %v990
        %v1012 = vpop.f32.mrf.mxu0
        %v1013 = vadd.f32 0.0, %v1012
        %1014 = vdwg.mxu0
        %v1016 = vsel %vm884, %v926, 0
        %v1019 = vsel %vm884, %v928, 0
        %1021 = vmatpush.msra.mxu0 0.0
        %1022 = vmatpush.msra.mxu0 0.0
        %1023 = vmatpush.msra.mxu0 0.0
        %1024 = vmatpush.msra.mxu0 0.0
        %1025 = vmatpush.msra.mxu0 0.0
        %1026 = vmatpush.msra.mxu0 0.0
        %1027 = vmatpush.msra.mxu0 0.0
        %1028 = vmatpush.msra.mxu0 0.0
        %1029 = vmatpush.msra.mxu0 0.0
        %1030 = vmatpush.msra.mxu0 0.0
        %1031 = vmatpush.msra.mxu0 0.0
        %1032 = vmatpush.msra.mxu0 0.0
        %1033 = vmatpush.msra.mxu0 0.0
        %1034 = vmatpush.msra.mxu0 0.0
        %1035 = vmatpush.msra.mxu0 %v741
        %1036 = vmatpush.msra.mxu0 %v740
        %1037 = vmatmul.f32.gmra.mxu0 %v1016
        %v1038 = vpop.f32.mrf.mxu0
        %v1039 = vadd.f32 0.0, %v1038
        %1040 = vmatmul.f32.gmra.mxu0 %v1019
        %v1041 = vpop.f32.mrf.mxu0
        %v1042 = vadd.f32 0.0, %v1041
        %1043 = vdwg.mxu0
        %v1045 = vsel %vm884, %v930, 0
        %v1048 = vsel %vm884, %v932, 0
        %1050 = vmatpush.msra.mxu0 0.0
        %1051 = vmatpush.msra.mxu0 0.0
        %1052 = vmatpush.msra.mxu0 0.0
        %1053 = vmatpush.msra.mxu0 0.0
        %1054 = vmatpush.msra.mxu0 0.0
        %1055 = vmatpush.msra.mxu0 0.0
        %1056 = vmatpush.msra.mxu0 0.0
        %1057 = vmatpush.msra.mxu0 0.0
        %1058 = vmatpush.msra.mxu0 0.0
        %1059 = vmatpush.msra.mxu0 0.0
        %1060 = vmatpush.msra.mxu0 0.0
        %1061 = vmatpush.msra.mxu0 0.0
        %1062 = vmatpush.msra.mxu0 0.0
        %1063 = vmatpush.msra.mxu0 0.0
        %1064 = vmatpush.msra.mxu0 %v743
        %1065 = vmatpush.msra.mxu0 %v742
        %1066 = vmatmul.f32.gmra.mxu0 %v1045
        %v1067 = vpop.f32.mrf.mxu0
        %v1068 = vadd.f32 0.0, %v1067
        %1069 = vmatmul.f32.gmra.mxu0 %v1048
        %v1070 = vpop.f32.mrf.mxu0
        %v1071 = vadd.f32 0.0, %v1070
        %1072 = vdwg.mxu0
        %v1073 = vrcp.pop %v935
        %v1074 = vrcp.pop %v938
        %v1075 = vrcp.pop %v941
        %v1076 = vrcp.pop %v944
        %v1077 = vrcp.pop %v947
        %v1078 = vrcp.pop %v950
        %v1079 = vrcp.pop %v953
        %v1080 = vrcp.pop %v956
        %v1081 = vmul.f32 %v981, %v1073
        %v1082 = vmul.f32 %v984, %v1074
        %v1083 = vmul.f32 %v1010, %v1075
        %v1084 = vmul.f32 %v1013, %v1076
        %v1085 = vmul.f32 %v1039, %v1077
        %v1086 = vmul.f32 %v1042, %v1078
        %v1087 = vmul.f32 %v1068, %v1079
        %v1088 = vmul.f32 %v1071, %v1080
        %1089 = vst.msk [vmem:[#allocation5] sm:$0xff] %vm688, %v1081
        %1090 = vst.msk [vmem:[#allocation5 + $0x8] sm:$0xff] %vm688, %v1082
        %1093 = vrot.lane.b32.xlu0 %v1083, 8
        %v1094 = vpop.permute.xlu0 %1093
        %1095 = vrot.lane.b32.xlu0 %v1084, 8
        %v1096 = vpop.permute.xlu0 %1095
        %vm1099 = vcmask 130112
        %1100 = vst.msk [vmem:[#allocation5] sm:$0xff] %vm1099, %v1094
        %1101 = vst.msk [vmem:[#allocation5 + $0x8] sm:$0xff] %vm1099, %v1096
        %1104 = vrot.lane.b32.xlu0 %v1085, 16
        %v1105 = vpop.permute.xlu0 %1104
        %1106 = vrot.lane.b32.xlu0 %v1086, 16
        %v1107 = vpop.permute.xlu0 %1106
        %vm1110 = vcmask 195712
        %1111 = vst.msk [vmem:[#allocation5] sm:$0xff] %vm1110, %v1105
        %1112 = vst.msk [vmem:[#allocation5 + $0x8] sm:$0xff] %vm1110, %v1107
        %1115 = vrot.lane.b32.xlu0 %v1087, 24
        %v1116 = vpop.permute.xlu0 %1115
        %1117 = vrot.lane.b32.xlu0 %v1088, 24
        %v1118 = vpop.permute.xlu0 %1117
        %vm1121 = vcmask 261312
        %1122 = vst.msk [vmem:[#allocation5] sm:$0xff] %vm1121, %v1116
        %1123 = vst.msk [vmem:[#allocation5 + $0x8] sm:$0xff] %vm1121, %v1118
        %v1124 = vld [vmem:[#allocation5] sm:$0xff]
        %v1125 = vld [vmem:[#allocation5 + $0x8] sm:$0xff]
        %v1126 = vld [vmem:[#allocation15] sm:$0xff]
        %v1127 = vld [vmem:[#allocation15 + $0x8] sm:$0xff]
        %v1128 = vld [vmem:[#allocation15 + $0x10] sm:$0xff]
        %v1129 = vld [vmem:[#allocation15 + $0x18] sm:$0xff]
        %v1130 = vld [vmem:[%s9] sm:$0x1]
        %v1132 = vperm.slane %v1130, 0
        %v1135 = vsel %vm656, %v1124, 0
        %v1138 = vsel %vm656, %v1125, 0
        %1140 = vmatpush.msra.mxu0 0.0
        %1141 = vmatpush.msra.mxu0 0.0
        %1142 = vmatpush.msra.mxu0 0.0
        %1143 = vmatpush.msra.mxu0 0.0
        %1144 = vmatpush.msra.mxu0 0.0
        %1145 = vmatpush.msra.mxu0 0.0
        %1146 = vmatpush.msra.mxu0 0.0
        %1147 = vmatpush.msra.mxu0 0.0
        %1148 = vmatpush.msra.mxu0 0.0
        %1149 = vmatpush.msra.mxu0 0.0
        %1150 = vmatpush.msra.mxu0 0.0
        %1151 = vmatpush.msra.mxu0 0.0
        %1152 = vmatpush.msra.mxu0 %v1129
        %1153 = vmatpush.msra.mxu0 %v1128
        %1154 = vmatpush.msra.mxu0 %v1127
        %1155 = vmatpush.msra.mxu0 %v1126
        %1156 = vmatmul.f32.gmra.mxu0 %v1135
        %v1157 = vpop.f32.mrf.mxu0
        %v1158 = vadd.f32 %v1132, %v1157
        %1159 = vmatmul.f32.gmra.mxu0 %v1138
        %v1160 = vpop.f32.mrf.mxu0
        %v1161 = vadd.f32 %v1132, %v1160
        %1162 = vdwg.mxu0
        %1163 = vst.msk [vmem:[%s505] sm:$0xff] %vm656, %v1158
        %1164 = vst.msk [vmem:[%s505 + $0x8] sm:$0xff] %vm656, %v1161
        %s1165 = sand.u32 %s276, 1
        %s1166 = scalar_lea.sflag [#allocation8], %s1165
        %s1167 = sand.u32 %s276, 1
        %s1168 = smul.addr %s1167, 16
        %s1169 = scalar_lea.vmem [#allocation17], %s1168
        // Predicated region
        $region89: #{tpu_custom_call.1} parent=59 // pred_check
          %p1170 = pneg %p286
        $region90: #{tpu_custom_call.1} parent=59 // pred_check_branch
          %1172 = sbr.rel (%p1170) target = $region92
        $region91: #{tpu_custom_call.1} parent=59 // pred_region
          %s1173 = smul.u32 2, %s37
          %1175 = vsyncadd %s1166, 0
          %s1176 = smul.addr %s36, 2
          %s1177 = sadd.s32 %s1173, %s1176
          %s1178 = smul.addr %s1177, 8
          %s1179 = scalar_lea.hbm %s10, %s1178
          %s1180 = sshll.u32 %s1169, 4
          %s1181 = int_to_ptr.vmem [resolvable:$true] %s1180
          %s1182 = sshll.u32 %s1179, 4
          %s1183 = int_to_ptr.hbm [resolvable:$true] %s1182
          %1188 = dma.vmem_to_hbm [thread:$0]  %s1181, 256, %s1183, %s1166, 128, 128, 8
        $region92: #{tpu_custom_call.1} parent=59 // pred_fallthru
          _
      $region60: #{tpu_custom_call.1} parent=5 // pred_fallthru
        _
      %p1189 = scmp.le.s32.totalorder 2, %s27
      // Predicated region
      $region93: #{tpu_custom_call.1} parent=5 // pred_check
        %p1190 = pneg %p1189
      $region94: #{tpu_custom_call.1} parent=5 // pred_check_branch
        %1192 = sbr.rel (%p1190) target = $region96
      $region95: #{tpu_custom_call.1} parent=5 // pred_region
        %s1193 = ssub.s32 %s27, 2
        // Predicated region
        $region97: #{tpu_custom_call.1} parent=95 // pred_check
          %p1194 = pneg %p292
        $region98: #{tpu_custom_call.1} parent=95 // pred_check_branch
          %1196 = sbr.rel (%p1194) target = $region100
        $region99: #{tpu_custom_call.1} parent=95 // pred_region
          %s1197 = sand.u32 %s277, 1
          %s1198 = scalar_lea.sflag [#allocation8], %s1197
          %s1199 = sand.u32 %s277, 1
          %s1200 = smul.addr %s1199, 16
          %s1201 = scalar_lea.vmem [#allocation17], %s1200
          %1203 = dma.done %s1198, 256
        $region100: #{tpu_custom_call.1} parent=95 // pred_fallthru
          _
      $region96: #{tpu_custom_call.1} parent=5 // pred_fallthru
        _
    $region6: #{tpu_custom_call.1} parent=1 // loop_footer
      %s31 = sadd.s32 1, %s27
    $region7: #{tpu_custom_call.1} parent=1 // loop_footer_branch
      %26 = sbr.rel target = $region3
    $region8: #{tpu_custom_call.1} parent=1 // loop_exit
      _
    %1204 = vsyncpa [#allocation7], 1
    %s1205 = scalar_lea.sflag [#allocation7], 1
    %1206 = vsyncpa %s1205, 1
    %1207 = vsyncpa [#allocation10], 1
    %s1208 = scalar_lea.sflag [#allocation10], 1
    %1209 = vsyncpa %s1208, 1
    %1210 = vsyncpa [#allocation13], 1
    %1211 = vsyncpa [#allocation16], 1
    %1212 = vsyncpa [#allocation8], 1
    %s1213 = scalar_lea.sflag [#allocation8], 1
    %1214 = vsyncpa %s1213, 1

</llo_original>
